<compile_context>
chip_gen: v7x
topology: tpu7x:2x2x1
jax: 0.10.0
libtpu: 0.0.40
codegen_flags: <defaults>
</compile_context>

<pallas_src>
import functools
import math

import jax
import jax.numpy as jnp
from jax.experimental import pallas as pl
from jax.experimental.pallas import tpu as pltpu


def _rztx_kernel(x_ref, wqkv_ref, bqkv_ref, wo_ref, bo_ref,
                 w1_ref, b1_ref, w2_ref, b2_ref, out_ref,
                 *, nhead, activation, matmul_dtype):
    """One batch block per grid step.

    x_ref:    (TB, S, D)        input block
    wqkv_ref: (D, 3D)           pre-transposed packed in_proj weight; Q cols pre-scaled by 1/sqrt(dh)
    bqkv_ref: (1, 3D)  f32      packed in_proj bias; Q part pre-scaled
    wo_ref:   (nhead, dh, D)    pre-transposed out_proj weight, head-major, resweight folded in
    bo_ref:   (1, D)   f32      out_proj bias * resweight
    w1_ref:   (D, F)            pre-transposed linear1 weight
    b1_ref:   (1, F)   f32
    w2_ref:   (F, D)            pre-transposed linear2 weight, resweight folded in
    b2_ref:   (1, D)   f32      linear2 bias * resweight
    out_ref:  (TB, S, D)
    """
    TB, S, D = x_ref.shape
    dh = D // nhead
    md = matmul_dtype
    M = TB * S

    # ---- load the block once and view it as a (TB*S, D) row slab [R1, R6] ----
    x = x_ref[...].reshape(M, D)                     # free: merges leading dims only
    x_md = x.astype(md)                              # cast once per step

    # ---- fused QKV projection: ONE MXU matmul per grid step [R1] ----
    qkv = jnp.dot(x_md, wqkv_ref[...],
                  preferred_element_type=jnp.float32) + bqkv_ref[...]   # (M, 3D) f32
    qkv = qkv.reshape(TB, S, 3 * D)                  # free: splits the leading dim only

    # ---- multi-head self-attention (softmax path stays f32) ----
    attn = None
    for h in range(nhead):                           # static unroll; nhead is small
        lo = h * dh
        q = qkv[:, :, lo:lo + dh]                    # (TB, S, dh); scale already folded in
        k = qkv[:, :, D + lo:D + lo + dh]
        v = qkv[:, :, 2 * D + lo:2 * D + lo + dh]

        # scores: contract on dh, batch over TB -- no k.T materialised [R2]
        s = jax.lax.dot_general(q, k, (((2,), (2,)), ((0,), (0,))),
                                preferred_element_type=jnp.float32)     # (TB, S, S)
        s = s - jnp.max(s, axis=-1, keepdims=True)
        e = jnp.exp(s)
        p = e * pl.reciprocal(jnp.sum(e, axis=-1, keepdims=True), approx=True)

        ctx = jax.lax.dot_general(p, v, (((2,), (1,)), ((0,), (0,))),
                                  preferred_element_type=jnp.float32)   # (TB, S, dh)

        # out-projection over the whole slab, decomposed along K into head-aligned
        # chunks; wo_ref[h] is a free leading-dim index of the (nhead, dh, D) weight [R1,R3].
        part = jnp.dot(ctx.reshape(M, dh).astype(md), wo_ref[h],
                       preferred_element_type=jnp.float32)              # (M, D)
        attn = part if attn is None else attn + part
    attn = attn + bo_ref[...]                        # resweight already folded in [R4]

    # ---- ReZero residual #1 (dropout1 = identity in eval) ----
    src1 = x + attn                                  # (M, D) f32

    # ---- feedforward: linear2(act(linear1(src1))), ONE matmul each [R1] ----
    h1 = jnp.dot(src1.astype(md), w1_ref[...],
                 preferred_element_type=jnp.float32) + b1_ref[...]      # (M, F)
    if activation == "relu":
        h1 = jnp.maximum(h1, 0.0)
    else:  # 'gelu' -- tanh approximation (EUP-friendly on TPU)
        h1 = jax.nn.gelu(h1, approximate=True)
    ffn = jnp.dot(h1.astype(md), w2_ref[...],
                  preferred_element_type=jnp.float32) + b2_ref[...]     # (M, D)

    # ---- ReZero residual #2 (dropout2 = identity) + lane-dense full-block store [R5] ----
    out_ref[...] = (src1 + ffn).reshape(TB, S, D).astype(out_ref.dtype)


def _prepare_params(params, *, nhead, matmul_dtype):
    """One-time wrapper-side prep (plain XLA, outside the kernel):
       * transpose weights so the kernel contracts on the leading axis (no in-kernel .T),
       * fold 1/sqrt(dh) into the Q rows of the packed in-projection (weight AND bias),
       * fold resweight into out_proj and linear2 (weight AND bias) [R4],
       * reshape out_proj to (nhead, dh, D) head-major for free leading-dim indexing [R3],
       * cast matmul operands to matmul_dtype; biases stay f32."""
    D = params["wo"].shape[0]
    dh = D // nhead
    scale = 1.0 / math.sqrt(dh)
    rw = params["resweight"].reshape(()).astype(jnp.float32)

    wqkv = params["wqkv"].astype(jnp.float32)               # (3D, D) PyTorch layout
    bqkv = params["bqkv"].reshape(-1).astype(jnp.float32)   # (3D,)
    qscale = jnp.concatenate([jnp.full((D,), scale, jnp.float32),
                              jnp.ones((2 * D,), jnp.float32)])
    wqkv = wqkv * qscale[:, None]                           # scale Q output rows
    bqkv = bqkv * qscale

    wo_heads = (params["wo"].T * rw).reshape(nhead, dh, D)  # (nhead, dh, D)
    bo = params["bo"].reshape(-1) * rw
    w2_t = params["w2"].T * rw                              # (F, D)
    b2 = params["b2"].reshape(-1) * rw

    return {
        "wqkv_t": wqkv.T.astype(matmul_dtype),              # (D, 3D)
        "bqkv": bqkv.reshape(1, -1),
        "wo_heads": wo_heads.astype(matmul_dtype),          # (nhead, dh, D)
        "bo": bo.reshape(1, -1).astype(jnp.float32),
        "w1_t": params["w1"].T.astype(matmul_dtype),        # (D, F)
        "b1": params["b1"].reshape(1, -1).astype(jnp.float32),
        "w2_t": w2_t.astype(matmul_dtype),                  # (F, D)
        "b2": b2.reshape(1, -1).astype(jnp.float32),
    }


def rztx_encoder_layer(src, params, *, nhead, batch_block=None,
                       matmul_dtype=jnp.bfloat16, activation="relu"):
    """src: (seq, batch, d_model) float32, like PyTorch with batch_first=False.
    matmul_dtype=jnp.float32 gives exact-f32 matmul operands (closer PyTorch parity)."""
    S, B, D = src.shape
    if D % nhead != 0:
        raise ValueError("d_model must be divisible by nhead")
    if activation not in ("relu", "gelu"):
        raise ValueError("activation must be 'relu' or 'gelu'")

    if batch_block is None:
        # >= 2 grid steps whenever B >= 2 so the 'parallel' batch axis can be sharded
        # across v7x's two TensorCores (harmless on single-TC v5e/v6e). [R8]
        target = max(1, B // 2)
        batch_block = next(tb for tb in range(target, 0, -1) if B % tb == 0)
    if B % batch_block != 0:
        raise ValueError("batch must be divisible by batch_block")
    TB = batch_block

    p = _prepare_params(params, nhead=nhead, matmul_dtype=matmul_dtype)

    # Batch-first layout around the kernel (see module-level layout note [R7]).
    x = jnp.transpose(src, (1, 0, 2))                        # (B, S, D)

    def wspec(arr):
        # Weights/biases: whole array resident in VMEM, constant index_map.  For
        # production sizes on v7x (64 MiB VMEM), add pipeline_mode=pl.Buffered(1) here
        # and/or tile the FFN reduction over an 'arbitrary' grid axis. [R9]
        zeros = (0,) * arr.ndim
        return pl.BlockSpec(arr.shape, lambda b: zeros)

    kernel = functools.partial(_rztx_kernel, nhead=nhead, activation=activation,
                               matmul_dtype=matmul_dtype)

    out = pl.pallas_call(
        kernel,
        out_shape=jax.ShapeDtypeStruct((B, S, D), src.dtype),
        grid_spec=pltpu.PrefetchScalarGridSpec(
            num_scalar_prefetch=0,
            grid=(B // TB,),
            in_specs=[
                pl.BlockSpec((TB, S, D), lambda b: (b, 0, 0)),   # activations
                wspec(p["wqkv_t"]), wspec(p["bqkv"]),
                wspec(p["wo_heads"]), wspec(p["bo"]),
                wspec(p["w1_t"]), wspec(p["b1"]),
                wspec(p["w2_t"]), wspec(p["b2"]),
            ],
            # Full-block output; lane-dense because D is a multiple of 128 here and at
            # the module's production width (512). [R5]
            out_specs=pl.BlockSpec((TB, S, D), lambda b: (b, 0, 0)),
        ),
        compiler_params=pltpu.CompilerParams(
            dimension_semantics=("parallel",),
            vmem_limit_bytes=32 * 1024 * 1024),
    )(x, p["wqkv_t"], p["bqkv"], p["wo_heads"], p["bo"],
      p["w1_t"], p["b1"], p["w2_t"], p["b2"])

    return jnp.transpose(out, (1, 0, 2))                     # back to (S, B, D)


def _reference_forward(src, params, *, nhead):
    """Pure-JAX f32 reference of the PyTorch forward (eval mode, relu), for validation."""
    S, B, D = src.shape
    dh = D // nhead
    x = src                                                  # (S, B, D)
    qkv = jnp.einsum("sbd,ed->sbe", x, params["wqkv"]) + params["bqkv"].reshape(-1)
    q, k, v = qkv[..., :D], qkv[..., D:2 * D], qkv[..., 2 * D:]
    q = q.reshape(S, B, nhead, dh) * (1.0 / math.sqrt(dh))
    k = k.reshape(S, B, nhead, dh)
    v = v.reshape(S, B, nhead, dh)
    s = jnp.einsum("qbhd,kbhd->bhqk", q, k)
    p = jax.nn.softmax(s, axis=-1)
    ctx = jnp.einsum("bhqk,kbhd->qbhd", p, v).reshape(S, B, D)
    attn = jnp.einsum("sbd,ed->sbe", ctx, params["wo"]) + params["bo"].reshape(-1)
    rw = params["resweight"][0]
    src1 = x + rw * attn
    h1 = jax.nn.relu(jnp.einsum("sbd,fd->sbf", src1, params["w1"])
                     + params["b1"].reshape(-1))
    ffn = jnp.einsum("sbf,df->sbd", h1, params["w2"]) + params["b2"].reshape(-1)
    return src1 + rw * ffn


def init_params(key, d_model, nhead, dim_feedforward):
    """Deterministic synthetic parameters with the same shapes as the PyTorch module."""
    ks = jax.random.split(key, 6)
    scale = 0.1
    return {
        # MultiheadAttention packed in-projection: (3*D, D) weight, (3*D,) bias
        "wqkv": scale * jax.random.normal(ks[0], (3 * d_model, d_model), jnp.float32),
        "bqkv": scale * jax.random.normal(ks[1], (3 * d_model,), jnp.float32),
        # out_proj: (D, D), (D,)
        "wo": scale * jax.random.normal(ks[2], (d_model, d_model), jnp.float32),
        "bo": jnp.zeros((d_model,), jnp.float32),
        # linear1: (F, D), (F,)   linear2: (D, F), (D,)
        "w1": scale * jax.random.normal(ks[3], (dim_feedforward, d_model), jnp.float32),
        "b1": scale * jax.random.normal(ks[4], (dim_feedforward,), jnp.float32),
        "w2": scale * jax.random.normal(ks[5], (d_model, dim_feedforward), jnp.float32),
        "b2": jnp.zeros((d_model,), jnp.float32),
        # resweight: PyTorch inits it to 0 (output == input); nonzero so the hot path runs.
        "resweight": jnp.array([0.1], jnp.float32),
    }


if __name__ == "__main__":
    # Small but layout-representative shapes: d_model a multiple of 128 (the module's own
    # example uses 512) so loads/stores are lane-dense [R5]; batch=4 -> 2 parallel grid
    # steps of batch_block=2 each [R8].
    SEQ, BATCH, D_MODEL, NHEAD, DIM_FF = 8, 4, 128, 4, 256

    key = jax.random.PRNGKey(0)
    k_src, k_par = jax.random.split(key)

    src = jax.random.normal(k_src, (SEQ, BATCH, D_MODEL), jnp.float32)
    params = init_params(k_par, D_MODEL, NHEAD, DIM_FF)

    out = rztx_encoder_layer(src, params, nhead=NHEAD)
    out = jax.block_until_ready(out)

    assert out.shape == (SEQ, BATCH, D_MODEL)
    assert out.dtype == jnp.float32
    assert bool(jnp.all(jnp.isfinite(out)))

    # Validate against a pure-JAX f32 reference (loose tolerance: bf16 matmul operands,
    # scale/resweight folded into bf16 weights, approx softmax reciprocal).
    ref = _reference_forward(src, params, nhead=NHEAD)
    assert bool(jnp.allclose(out, ref, atol=5e-2, rtol=5e-2)), (
        f"mismatch vs reference: max abs err {float(jnp.max(jnp.abs(out - ref)))}")

    print("KERNEL_OK")
</pallas_src>

<mosaic_0001>
module attributes {stable_mosaic.version = 11 : i64} {
  func.func @_rztx_kernel(%arg0: i32, %arg1: memref<2x8x128xf32, #tpu.memory_space<vmem>>, %arg2: memref<128x384xbf16, #tpu.memory_space<vmem>>, %arg3: memref<1x384xf32, #tpu.memory_space<vmem>>, %arg4: memref<4x32x128xbf16, #tpu.memory_space<vmem>>, %arg5: memref<1x128xf32, #tpu.memory_space<vmem>>, %arg6: memref<128x256xbf16, #tpu.memory_space<vmem>>, %arg7: memref<1x256xf32, #tpu.memory_space<vmem>>, %arg8: memref<256x128xbf16, #tpu.memory_space<vmem>>, %arg9: memref<1x128xf32, #tpu.memory_space<vmem>>, %arg10: memref<2x8x128xf32, #tpu.memory_space<vmem>>) attributes {dimension_semantics = [#tpu.dimension_semantics<parallel>], iteration_bounds = array<i64: 2>, scalar_prefetch = 0 : i64, scratch_operands = 0 : i64, tpu.core_type = #tpu.core_type<tc>, window_params = [{transform_indices = @transform_0, window_bounds = array<i64: 2, 8, 128>}, {pipeline_mode = #tpu.pipeline_mode<synchronous>, transform_indices = @transform_1, window_bounds = array<i64: 128, 384>}, {pipeline_mode = #tpu.pipeline_mode<synchronous>, transform_indices = @transform_2, window_bounds = array<i64: 1, 384>}, {pipeline_mode = #tpu.pipeline_mode<synchronous>, transform_indices = @transform_3, window_bounds = array<i64: 4, 32, 128>}, {pipeline_mode = #tpu.pipeline_mode<synchronous>, transform_indices = @transform_4, window_bounds = array<i64: 1, 128>}, {pipeline_mode = #tpu.pipeline_mode<synchronous>, transform_indices = @transform_5, window_bounds = array<i64: 128, 256>}, {pipeline_mode = #tpu.pipeline_mode<synchronous>, transform_indices = @transform_6, window_bounds = array<i64: 1, 256>}, {pipeline_mode = #tpu.pipeline_mode<synchronous>, transform_indices = @transform_7, window_bounds = array<i64: 256, 128>}, {pipeline_mode = #tpu.pipeline_mode<synchronous>, transform_indices = @transform_8, window_bounds = array<i64: 1, 128>}, {transform_indices = @transform_9, window_bounds = array<i64: 2, 8, 128>}]} {
    %c0 = arith.constant 0 : index
    %c0_0 = arith.constant 0 : index
    %c0_1 = arith.constant 0 : index
    %0 = vector.load %arg1[%c0, %c0_0, %c0_1] : memref<2x8x128xf32, #tpu.memory_space<vmem>>, vector<2x8x128xf32>
    %1 = vector.shape_cast %0 : vector<2x8x128xf32> to vector<16x128xf32>
    %2 = arith.truncf %1 : vector<16x128xf32> to vector<16x128xbf16>
    %c0_2 = arith.constant 0 : index
    %c0_3 = arith.constant 0 : index
    %3 = vector.load %arg2[%c0_2, %c0_3] : memref<128x384xbf16, #tpu.memory_space<vmem>>, vector<128x384xbf16>
    %cst = arith.constant dense<0.000000e+00> : vector<16x384xf32>
    %4 = tpu.matmul %2, %3, %cst {dimension_numbers = #tpu.dot_dimension_numbers<[1], [0], [0], [1], [0, 0, 1, 1], [], []>} : vector<16x128xbf16>, vector<128x384xbf16>, vector<16x384xf32> -> vector<16x384xf32>
    %c0_4 = arith.constant 0 : index
    %c0_5 = arith.constant 0 : index
    %5 = vector.load %arg3[%c0_4, %c0_5] : memref<1x384xf32, #tpu.memory_space<vmem>>, vector<1x384xf32>
    %6 = vector.broadcast %5 : vector<1x384xf32> to vector<16x384xf32>
    %7 = arith.addf %4, %6 : vector<16x384xf32>
    %8 = vector.shape_cast %7 : vector<16x384xf32> to vector<2x8x384xf32>
    %9 = vector.extract_strided_slice %8 {offsets = [0, 0, 0], sizes = [2, 8, 32], strides = [1, 1, 1]} : vector<2x8x384xf32> to vector<2x8x32xf32>
    %10 = vector.extract_strided_slice %8 {offsets = [0, 0, 128], sizes = [2, 8, 32], strides = [1, 1, 1]} : vector<2x8x384xf32> to vector<2x8x32xf32>
    %11 = vector.extract_strided_slice %8 {offsets = [0, 0, 256], sizes = [2, 8, 32], strides = [1, 1, 1]} : vector<2x8x384xf32> to vector<2x8x32xf32>
    %cst_6 = arith.constant dense<0.000000e+00> : vector<2x8x8xf32>
    %12 = tpu.matmul %9, %10, %cst_6 {dimension_numbers = #tpu.dot_dimension_numbers<[2], [2], [1], [1], [0, 0, 0, 1, 1, 1], [0], [0]>} : vector<2x8x32xf32>, vector<2x8x32xf32>, vector<2x8x8xf32> -> vector<2x8x8xf32>
    %cst_7 = arith.constant dense<0xFF800000> : vector<2x8xf32>
    %13 = vector.multi_reduction <maximumf>, %12, %cst_7 [2] : vector<2x8x8xf32> to vector<2x8xf32>
    %14 = vector.shape_cast %13 : vector<2x8xf32> to vector<2x8x1xf32>
    %15 = vector.broadcast %14 : vector<2x8x1xf32> to vector<2x8x8xf32>
    %16 = arith.subf %12, %15 : vector<2x8x8xf32>
    %17 = math.exp %16 : vector<2x8x8xf32>
    %cst_8 = arith.constant dense<0.000000e+00> : vector<2x8xf32>
    %18 = vector.multi_reduction <add>, %17, %cst_8 [2] : vector<2x8x8xf32> to vector<2x8xf32>
    %19 = vector.shape_cast %18 : vector<2x8xf32> to vector<2x8x1xf32>
    %20 = tpu.reciprocal %19 {approx = true} : vector<2x8x1xf32> -> vector<2x8x1xf32>
    %21 = vector.broadcast %20 : vector<2x8x1xf32> to vector<2x8x8xf32>
    %22 = arith.mulf %17, %21 : vector<2x8x8xf32>
    %cst_9 = arith.constant dense<0.000000e+00> : vector<2x8x32xf32>
    %23 = tpu.matmul %22, %11, %cst_9 {dimension_numbers = #tpu.dot_dimension_numbers<[2], [1], [1], [2], [0, 0, 0, 1, 1, 2], [0], [0]>} : vector<2x8x8xf32>, vector<2x8x32xf32>, vector<2x8x32xf32> -> vector<2x8x32xf32>
    %24 = vector.shape_cast %23 : vector<2x8x32xf32> to vector<16x32xf32>
    %25 = arith.truncf %24 : vector<16x32xf32> to vector<16x32xbf16>
    %c0_10 = arith.constant 0 : index
    %c0_11 = arith.constant 0 : index
    %c0_12 = arith.constant 0 : index
    %26 = vector.load %arg4[%c0_10, %c0_11, %c0_12] : memref<4x32x128xbf16, #tpu.memory_space<vmem>>, vector<1x32x128xbf16>
    %27 = vector.shape_cast %26 : vector<1x32x128xbf16> to vector<32x128xbf16>
    %cst_13 = arith.constant dense<0.000000e+00> : vector<16x128xf32>
    %28 = tpu.matmul %25, %27, %cst_13 {dimension_numbers = #tpu.dot_dimension_numbers<[1], [0], [0], [1], [0, 0, 1, 1], [], []>} : vector<16x32xbf16>, vector<32x128xbf16>, vector<16x128xf32> -> vector<16x128xf32>
    %29 = vector.extract_strided_slice %8 {offsets = [0, 0, 32], sizes = [2, 8, 32], strides = [1, 1, 1]} : vector<2x8x384xf32> to vector<2x8x32xf32>
    %30 = vector.extract_strided_slice %8 {offsets = [0, 0, 160], sizes = [2, 8, 32], strides = [1, 1, 1]} : vector<2x8x384xf32> to vector<2x8x32xf32>
    %31 = vector.extract_strided_slice %8 {offsets = [0, 0, 288], sizes = [2, 8, 32], strides = [1, 1, 1]} : vector<2x8x384xf32> to vector<2x8x32xf32>
    %cst_14 = arith.constant dense<0.000000e+00> : vector<2x8x8xf32>
    %32 = tpu.matmul %29, %30, %cst_14 {dimension_numbers = #tpu.dot_dimension_numbers<[2], [2], [1], [1], [0, 0, 0, 1, 1, 1], [0], [0]>} : vector<2x8x32xf32>, vector<2x8x32xf32>, vector<2x8x8xf32> -> vector<2x8x8xf32>
    %cst_15 = arith.constant dense<0xFF800000> : vector<2x8xf32>
    %33 = vector.multi_reduction <maximumf>, %32, %cst_15 [2] : vector<2x8x8xf32> to vector<2x8xf32>
    %34 = vector.shape_cast %33 : vector<2x8xf32> to vector<2x8x1xf32>
    %35 = vector.broadcast %34 : vector<2x8x1xf32> to vector<2x8x8xf32>
    %36 = arith.subf %32, %35 : vector<2x8x8xf32>
    %37 = math.exp %36 : vector<2x8x8xf32>
    %cst_16 = arith.constant dense<0.000000e+00> : vector<2x8xf32>
    %38 = vector.multi_reduction <add>, %37, %cst_16 [2] : vector<2x8x8xf32> to vector<2x8xf32>
    %39 = vector.shape_cast %38 : vector<2x8xf32> to vector<2x8x1xf32>
    %40 = tpu.reciprocal %39 {approx = true} : vector<2x8x1xf32> -> vector<2x8x1xf32>
    %41 = vector.broadcast %40 : vector<2x8x1xf32> to vector<2x8x8xf32>
    %42 = arith.mulf %37, %41 : vector<2x8x8xf32>
    %cst_17 = arith.constant dense<0.000000e+00> : vector<2x8x32xf32>
    %43 = tpu.matmul %42, %31, %cst_17 {dimension_numbers = #tpu.dot_dimension_numbers<[2], [1], [1], [2], [0, 0, 0, 1, 1, 2], [0], [0]>} : vector<2x8x8xf32>, vector<2x8x32xf32>, vector<2x8x32xf32> -> vector<2x8x32xf32>
    %44 = vector.shape_cast %43 : vector<2x8x32xf32> to vector<16x32xf32>
    %45 = arith.truncf %44 : vector<16x32xf32> to vector<16x32xbf16>
    %c1 = arith.constant 1 : index
    %c0_18 = arith.constant 0 : index
    %c0_19 = arith.constant 0 : index
    %46 = vector.load %arg4[%c1, %c0_18, %c0_19] : memref<4x32x128xbf16, #tpu.memory_space<vmem>>, vector<1x32x128xbf16>
    %47 = vector.shape_cast %46 : vector<1x32x128xbf16> to vector<32x128xbf16>
    %cst_20 = arith.constant dense<0.000000e+00> : vector<16x128xf32>
    %48 = tpu.matmul %45, %47, %cst_20 {dimension_numbers = #tpu.dot_dimension_numbers<[1], [0], [0], [1], [0, 0, 1, 1], [], []>} : vector<16x32xbf16>, vector<32x128xbf16>, vector<16x128xf32> -> vector<16x128xf32>
    %49 = arith.addf %28, %48 : vector<16x128xf32>
    %50 = vector.extract_strided_slice %8 {offsets = [0, 0, 64], sizes = [2, 8, 32], strides = [1, 1, 1]} : vector<2x8x384xf32> to vector<2x8x32xf32>
    %51 = vector.extract_strided_slice %8 {offsets = [0, 0, 192], sizes = [2, 8, 32], strides = [1, 1, 1]} : vector<2x8x384xf32> to vector<2x8x32xf32>
    %52 = vector.extract_strided_slice %8 {offsets = [0, 0, 320], sizes = [2, 8, 32], strides = [1, 1, 1]} : vector<2x8x384xf32> to vector<2x8x32xf32>
    %cst_21 = arith.constant dense<0.000000e+00> : vector<2x8x8xf32>
    %53 = tpu.matmul %50, %51, %cst_21 {dimension_numbers = #tpu.dot_dimension_numbers<[2], [2], [1], [1], [0, 0, 0, 1, 1, 1], [0], [0]>} : vector<2x8x32xf32>, vector<2x8x32xf32>, vector<2x8x8xf32> -> vector<2x8x8xf32>
    %cst_22 = arith.constant dense<0xFF800000> : vector<2x8xf32>
    %54 = vector.multi_reduction <maximumf>, %53, %cst_22 [2] : vector<2x8x8xf32> to vector<2x8xf32>
    %55 = vector.shape_cast %54 : vector<2x8xf32> to vector<2x8x1xf32>
    %56 = vector.broadcast %55 : vector<2x8x1xf32> to vector<2x8x8xf32>
    %57 = arith.subf %53, %56 : vector<2x8x8xf32>
    %58 = math.exp %57 : vector<2x8x8xf32>
    %cst_23 = arith.constant dense<0.000000e+00> : vector<2x8xf32>
    %59 = vector.multi_reduction <add>, %58, %cst_23 [2] : vector<2x8x8xf32> to vector<2x8xf32>
    %60 = vector.shape_cast %59 : vector<2x8xf32> to vector<2x8x1xf32>
    %61 = tpu.reciprocal %60 {approx = true} : vector<2x8x1xf32> -> vector<2x8x1xf32>
    %62 = vector.broadcast %61 : vector<2x8x1xf32> to vector<2x8x8xf32>
    %63 = arith.mulf %58, %62 : vector<2x8x8xf32>
    %cst_24 = arith.constant dense<0.000000e+00> : vector<2x8x32xf32>
    %64 = tpu.matmul %63, %52, %cst_24 {dimension_numbers = #tpu.dot_dimension_numbers<[2], [1], [1], [2], [0, 0, 0, 1, 1, 2], [0], [0]>} : vector<2x8x8xf32>, vector<2x8x32xf32>, vector<2x8x32xf32> -> vector<2x8x32xf32>
    %65 = vector.shape_cast %64 : vector<2x8x32xf32> to vector<16x32xf32>
    %66 = arith.truncf %65 : vector<16x32xf32> to vector<16x32xbf16>
    %c2 = arith.constant 2 : index
    %c0_25 = arith.constant 0 : index
    %c0_26 = arith.constant 0 : index
    %67 = vector.load %arg4[%c2, %c0_25, %c0_26] : memref<4x32x128xbf16, #tpu.memory_space<vmem>>, vector<1x32x128xbf16>
    %68 = vector.shape_cast %67 : vector<1x32x128xbf16> to vector<32x128xbf16>
    %cst_27 = arith.constant dense<0.000000e+00> : vector<16x128xf32>
    %69 = tpu.matmul %66, %68, %cst_27 {dimension_numbers = #tpu.dot_dimension_numbers<[1], [0], [0], [1], [0, 0, 1, 1], [], []>} : vector<16x32xbf16>, vector<32x128xbf16>, vector<16x128xf32> -> vector<16x128xf32>
    %70 = arith.addf %49, %69 : vector<16x128xf32>
    %71 = vector.extract_strided_slice %8 {offsets = [0, 0, 96], sizes = [2, 8, 32], strides = [1, 1, 1]} : vector<2x8x384xf32> to vector<2x8x32xf32>
    %72 = vector.extract_strided_slice %8 {offsets = [0, 0, 224], sizes = [2, 8, 32], strides = [1, 1, 1]} : vector<2x8x384xf32> to vector<2x8x32xf32>
    %73 = vector.extract_strided_slice %8 {offsets = [0, 0, 352], sizes = [2, 8, 32], strides = [1, 1, 1]} : vector<2x8x384xf32> to vector<2x8x32xf32>
    %cst_28 = arith.constant dense<0.000000e+00> : vector<2x8x8xf32>
    %74 = tpu.matmul %71, %72, %cst_28 {dimension_numbers = #tpu.dot_dimension_numbers<[2], [2], [1], [1], [0, 0, 0, 1, 1, 1], [0], [0]>} : vector<2x8x32xf32>, vector<2x8x32xf32>, vector<2x8x8xf32> -> vector<2x8x8xf32>
    %cst_29 = arith.constant dense<0xFF800000> : vector<2x8xf32>
    %75 = vector.multi_reduction <maximumf>, %74, %cst_29 [2] : vector<2x8x8xf32> to vector<2x8xf32>
    %76 = vector.shape_cast %75 : vector<2x8xf32> to vector<2x8x1xf32>
    %77 = vector.broadcast %76 : vector<2x8x1xf32> to vector<2x8x8xf32>
    %78 = arith.subf %74, %77 : vector<2x8x8xf32>
    %79 = math.exp %78 : vector<2x8x8xf32>
    %cst_30 = arith.constant dense<0.000000e+00> : vector<2x8xf32>
    %80 = vector.multi_reduction <add>, %79, %cst_30 [2] : vector<2x8x8xf32> to vector<2x8xf32>
    %81 = vector.shape_cast %80 : vector<2x8xf32> to vector<2x8x1xf32>
    %82 = tpu.reciprocal %81 {approx = true} : vector<2x8x1xf32> -> vector<2x8x1xf32>
    %83 = vector.broadcast %82 : vector<2x8x1xf32> to vector<2x8x8xf32>
    %84 = arith.mulf %79, %83 : vector<2x8x8xf32>
    %cst_31 = arith.constant dense<0.000000e+00> : vector<2x8x32xf32>
    %85 = tpu.matmul %84, %73, %cst_31 {dimension_numbers = #tpu.dot_dimension_numbers<[2], [1], [1], [2], [0, 0, 0, 1, 1, 2], [0], [0]>} : vector<2x8x8xf32>, vector<2x8x32xf32>, vector<2x8x32xf32> -> vector<2x8x32xf32>
    %86 = vector.shape_cast %85 : vector<2x8x32xf32> to vector<16x32xf32>
    %87 = arith.truncf %86 : vector<16x32xf32> to vector<16x32xbf16>
    %c3 = arith.constant 3 : index
    %c0_32 = arith.constant 0 : index
    %c0_33 = arith.constant 0 : index
    %88 = vector.load %arg4[%c3, %c0_32, %c0_33] : memref<4x32x128xbf16, #tpu.memory_space<vmem>>, vector<1x32x128xbf16>
    %89 = vector.shape_cast %88 : vector<1x32x128xbf16> to vector<32x128xbf16>
    %cst_34 = arith.constant dense<0.000000e+00> : vector<16x128xf32>
    %90 = tpu.matmul %87, %89, %cst_34 {dimension_numbers = #tpu.dot_dimension_numbers<[1], [0], [0], [1], [0, 0, 1, 1], [], []>} : vector<16x32xbf16>, vector<32x128xbf16>, vector<16x128xf32> -> vector<16x128xf32>
    %91 = arith.addf %70, %90 : vector<16x128xf32>
    %c0_35 = arith.constant 0 : index
    %c0_36 = arith.constant 0 : index
    %92 = vector.load %arg5[%c0_35, %c0_36] : memref<1x128xf32, #tpu.memory_space<vmem>>, vector<1x128xf32>
    %93 = vector.broadcast %92 : vector<1x128xf32> to vector<16x128xf32>
    %94 = arith.addf %91, %93 : vector<16x128xf32>
    %95 = arith.addf %1, %94 : vector<16x128xf32>
    %96 = arith.truncf %95 : vector<16x128xf32> to vector<16x128xbf16>
    %c0_37 = arith.constant 0 : index
    %c0_38 = arith.constant 0 : index
    %97 = vector.load %arg6[%c0_37, %c0_38] : memref<128x256xbf16, #tpu.memory_space<vmem>>, vector<128x256xbf16>
    %cst_39 = arith.constant dense<0.000000e+00> : vector<16x256xf32>
    %98 = tpu.matmul %96, %97, %cst_39 {dimension_numbers = #tpu.dot_dimension_numbers<[1], [0], [0], [1], [0, 0, 1, 1], [], []>} : vector<16x128xbf16>, vector<128x256xbf16>, vector<16x256xf32> -> vector<16x256xf32>
    %c0_40 = arith.constant 0 : index
    %c0_41 = arith.constant 0 : index
    %99 = vector.load %arg7[%c0_40, %c0_41] : memref<1x256xf32, #tpu.memory_space<vmem>>, vector<1x256xf32>
    %100 = vector.broadcast %99 : vector<1x256xf32> to vector<16x256xf32>
    %101 = arith.addf %98, %100 : vector<16x256xf32>
    %cst_42 = arith.constant 0.000000e+00 : f32
    %102 = vector.broadcast %cst_42 : f32 to vector<16x256xf32>
    %103 = arith.maximumf %101, %102 : vector<16x256xf32>
    %104 = arith.truncf %103 : vector<16x256xf32> to vector<16x256xbf16>
    %c0_43 = arith.constant 0 : index
    %c0_44 = arith.constant 0 : index
    %105 = vector.load %arg8[%c0_43, %c0_44] : memref<256x128xbf16, #tpu.memory_space<vmem>>, vector<256x128xbf16>
    %cst_45 = arith.constant dense<0.000000e+00> : vector<16x128xf32>
    %106 = tpu.matmul %104, %105, %cst_45 {dimension_numbers = #tpu.dot_dimension_numbers<[1], [0], [0], [1], [0, 0, 1, 1], [], []>} : vector<16x256xbf16>, vector<256x128xbf16>, vector<16x128xf32> -> vector<16x128xf32>
    %c0_46 = arith.constant 0 : index
    %c0_47 = arith.constant 0 : index
    %107 = vector.load %arg9[%c0_46, %c0_47] : memref<1x128xf32, #tpu.memory_space<vmem>>, vector<1x128xf32>
    %108 = vector.broadcast %107 : vector<1x128xf32> to vector<16x128xf32>
    %109 = arith.addf %106, %108 : vector<16x128xf32>
    %110 = arith.addf %95, %109 : vector<16x128xf32>
    %111 = vector.shape_cast %110 : vector<16x128xf32> to vector<2x8x128xf32>
    %c0_48 = arith.constant 0 : index
    %c0_49 = arith.constant 0 : index
    %c0_50 = arith.constant 0 : index
    %112 = vector.load %arg10[%c0_48, %c0_49, %c0_50] : memref<2x8x128xf32, #tpu.memory_space<vmem>>, vector<2x8x128xf32>
    tpu.vector_store %arg10[%c0_48, %c0_49, %c0_50], %111 {strides = array<i32>} : memref<2x8x128xf32, #tpu.memory_space<vmem>>, vector<2x8x128xf32>,
    return
  }
  func.func @transform_0(%arg0: i32) -> (i32, i32, i32) {
    %c0_i32 = arith.constant 0 : i32
    %c0_i32_0 = arith.constant 0 : i32
    %c0_i32_1 = arith.constant 0 : i32
    return %arg0, %c0_i32, %c0_i32_0 : i32, i32, i32
  }
  func.func @transform_1(%arg0: i32) -> (i32, i32) {
    %c0_i32 = arith.constant 0 : i32
    %c0_i32_0 = arith.constant 0 : i32
    %c0_i32_1 = arith.constant 0 : i32
    return %c0_i32, %c0_i32_0 : i32, i32
  }
  func.func @transform_2(%arg0: i32) -> (i32, i32) {
    %c0_i32 = arith.constant 0 : i32
    %c0_i32_0 = arith.constant 0 : i32
    %c0_i32_1 = arith.constant 0 : i32
    return %c0_i32, %c0_i32_0 : i32, i32
  }
  func.func @transform_3(%arg0: i32) -> (i32, i32, i32) {
    %c0_i32 = arith.constant 0 : i32
    %c0_i32_0 = arith.constant 0 : i32
    %c0_i32_1 = arith.constant 0 : i32
    %c0_i32_2 = arith.constant 0 : i32
    return %c0_i32, %c0_i32_0, %c0_i32_1 : i32, i32, i32
  }
  func.func @transform_4(%arg0: i32) -> (i32, i32) {
    %c0_i32 = arith.constant 0 : i32
    %c0_i32_0 = arith.constant 0 : i32
    %c0_i32_1 = arith.constant 0 : i32
    return %c0_i32, %c0_i32_0 : i32, i32
  }
  func.func @transform_5(%arg0: i32) -> (i32, i32) {
    %c0_i32 = arith.constant 0 : i32
    %c0_i32_0 = arith.constant 0 : i32
    %c0_i32_1 = arith.constant 0 : i32
    return %c0_i32, %c0_i32_0 : i32, i32
  }
  func.func @transform_6(%arg0: i32) -> (i32, i32) {
    %c0_i32 = arith.constant 0 : i32
    %c0_i32_0 = arith.constant 0 : i32
    %c0_i32_1 = arith.constant 0 : i32
    return %c0_i32, %c0_i32_0 : i32, i32
  }
  func.func @transform_7(%arg0: i32) -> (i32, i32) {
    %c0_i32 = arith.constant 0 : i32
    %c0_i32_0 = arith.constant 0 : i32
    %c0_i32_1 = arith.constant 0 : i32
    return %c0_i32, %c0_i32_0 : i32, i32
  }
  func.func @transform_8(%arg0: i32) -> (i32, i32) {
    %c0_i32 = arith.constant 0 : i32
    %c0_i32_0 = arith.constant 0 : i32
    %c0_i32_1 = arith.constant 0 : i32
    return %c0_i32, %c0_i32_0 : i32, i32
  }
  func.func @transform_9(%arg0: i32) -> (i32, i32, i32) {
    %c0_i32 = arith.constant 0 : i32
    %c0_i32_0 = arith.constant 0 : i32
    %c0_i32_1 = arith.constant 0 : i32
    return %arg0, %c0_i32, %c0_i32_0 : i32, i32, i32
  }
}

</mosaic_0001>

<llo_original>
// kernel: tpu_custom_call.1
$region0: #{tpu_custom_call.1}
  #allocation0 [shape = 'u32[]', space=smem, size = 0x4, offset = 0x4, fixed_abs, tag = 'smem constant byte address 0x4 - core index']
  #allocation1 [shape = 'u32[144,128]{1,0:T(1,128)}', space=vmem, size = 0x12000, scoped, tag = 'internal scratch']
  %s0 = inlined_call_operand.hbm [shape: f32[4,8,128], index: 0, kind: input, shape index: {}]
  %s1 = inlined_call_operand.hbm [shape: bf16[128,384], index: 1, kind: input, shape index: {}]
  %s2 = inlined_call_operand.vmem [shape: f32[1,384], index: 2, kind: input, shape index: {}]
  %s3 = inlined_call_operand.hbm [shape: bf16[4,32,128], index: 3, kind: input, shape index: {}]
  %s4 = inlined_call_operand.vmem [shape: f32[1,128], index: 4, kind: input, shape index: {}]
  %s5 = inlined_call_operand.hbm [shape: bf16[128,256], index: 5, kind: input, shape index: {}]
  %s6 = inlined_call_operand.vmem [shape: f32[1,256], index: 6, kind: input, shape index: {}]
  %s7 = inlined_call_operand.hbm [shape: bf16[256,128], index: 7, kind: input, shape index: {}]
  %s8 = inlined_call_operand.vmem [shape: f32[1,128], index: 8, kind: input, shape index: {}]
  %s9 = inlined_call_operand.hbm [shape: f32[4,8,128], index: 9, kind: output, shape index: {}]
  %s10 = sld [smem:[#allocation0]]
  $region89: #{tpu_custom_call.1} parent=0
    _
  %s12 = ssub.s32 1, %s10
  %s13 = scalar_select 0, %s12, %s10
  $region1: #{tpu_custom_call.1} parent=0
    #allocation2 [shape = 'u8[16384]{0}', space=vmem, size = 0x4000, scoped, tag = 'input window, operand 0']
    #allocation3 [shape = 's32[2]{0}', space=sflag, size = 0x8, scoped, tag = 'scoped memory for tpu_custom_call.1']
    #allocation4 [shape = 's32[2]{0}', space=sflag, size = 0x8, scoped, tag = 'scoped memory for tpu_custom_call.1']
    #allocation5 [shape = 'u8[98304]{0}', space=vmem, size = 0x18000, scoped, tag = 'input window, operand 1, single buffered']
    #allocation6 [shape = 's32[1]{0}', space=sflag, size = 0x4, scoped, tag = 'scoped memory for tpu_custom_call.1']
    #allocation7 [shape = 'u8[32768]{0}', space=vmem, size = 0x8000, scoped, tag = 'input window, operand 3, single buffered']
    #allocation8 [shape = 'u8[65536]{0}', space=vmem, size = 0x10000, scoped, tag = 'input window, operand 5, single buffered']
    #allocation9 [shape = 's32[1]{0}', space=sflag, size = 0x4, scoped, tag = 'scoped memory for tpu_custom_call.1']
    #allocation10 [shape = 'u8[65536]{0}', space=vmem, size = 0x10000, scoped, tag = 'input window, operand 7, single buffered']
    #allocation11 [shape = 'u8[16384]{0}', space=vmem, size = 0x4000, scoped, tag = 'output window, operand 0']
    %14 = vsyncpa [#allocation3], 0
    %s15 = scalar_lea.sflag [#allocation3], 1
    %16 = vsyncpa %s15, 0
    %17 = vsyncpa [#allocation6], 0
    %18 = vsyncpa [#allocation9], 0
    %19 = vsyncpa [#allocation4], 0
    %s20 = scalar_lea.sflag [#allocation4], 1
    %21 = vsyncpa %s20, 0
    loop: start=0, step=1, limit=4
    $region2: #{tpu_custom_call.1} parent=1 // loop_pre_header
      _
    $region3: #{tpu_custom_call.1} parent=1 // loop_header
      %s23 = sphi 0, %s27
      %p24 = scmp.ge.s32.totalorder %s23, 4
      %s33 = sphi 0, %s35
      %s36 = sphi 0, %s33
      %s37 = sphi 0, %s36
      %s53 = sphi 0, %s37
      %s57 = sphi 0, %s57
      %s59 = sphi 0, %s57
      %s60 = sphi 0, %s59
      %s74 = sphi 0, %s60
      %s78 = sphi 0, %s78
      %s80 = sphi 0, %s78
      %s81 = sphi 0, %s80
      %s95 = sphi 0, %s81
      %s99 = sphi 0, %s99
      %s101 = sphi 0, %s99
      %s102 = sphi 0, %s101
      %s116 = sphi 0, %s102
      %s120 = sphi 0, %s120
      %s122 = sphi 0, %s120
      %s123 = sphi 0, %s122
      %s137 = sphi 0, %s123
      %s141 = sphi 0, %s141
      %s143 = sphi 0, %s141
      %s144 = sphi 0, %s143
      %s158 = sphi 0, %s144
      %s162 = sphi 0, %s162
      %s164 = sphi 0, %s162
      %s165 = sphi 0, %s164
      %s179 = sphi 0, %s165
      %s183 = sphi 0, %s183
      %s185 = sphi 0, %s183
      %s186 = sphi 0, %s185
      %s200 = sphi 0, %s186
      %s204 = sphi 0, %s204
      %s206 = sphi 0, %s204
      %s207 = sphi 0, %s206
      %s221 = sphi 0, %s207
      %s227 = sphi 0, %s229
      %s230 = sphi 0, %s227
      %s231 = sphi 0, %s230
      %s247 = sphi 0, %s231
    $region4: #{tpu_custom_call.1} parent=1 // loop_header_branch
      %26 = sbr.rel (%p24) target = $region8
    $region5: #{tpu_custom_call.1} parent=1 // loop_body
      %s28 = ssub.s32 %s23, 1
      %s29 = ssub.s32 %s23, 2
      %s30 = sadd.s32 %s23, 1
      %s31 = ssub.s32 %s23, %s30
      %p32 = scmp.eq.s32.totalorder %s31, 0
      %s34 = sadd.s32 %s33, 1
      %s35 = scalar_select %p32, %s33, %s34
      %p38 = pneg %p32
      %p39 = scmp.eq.s32.totalorder %s23, 1
      %p40 = por %p38, %p39
      %p41 = scmp.ne.s32.totalorder %s33, %s36
      %p42 = scmp.eq.s32.totalorder %s23, 0
      %p43 = por %p41, %p42
      %p44 = scmp.ne.s32.totalorder %s33, %s36
      %p45 = scmp.eq.s32.totalorder %s28, 1
      %p46 = por %p44, %p45
      %p47 = scmp.ne.s32.totalorder %s36, %s37
      %p48 = scmp.eq.s32.totalorder %s28, 0
      %p49 = por %p47, %p48
      %p50 = scmp.ne.s32.totalorder %s36, %s37
      %p51 = scmp.eq.s32.totalorder %s29, 1
      %p52 = por %p50, %p51
      %p54 = scmp.ne.s32.totalorder %s37, %s53
      %p55 = scmp.eq.s32.totalorder %s29, 0
      %p56 = por %p54, %p55
      %s58 = sadd.s32 %s57, 1
      %p61 = scmp.eq.s32.totalorder %s23, 1
      %p62 = scmp.ne.s32.totalorder %s57, %s59
      %p63 = scmp.eq.s32.totalorder %s23, 0
      %p64 = por %p62, %p63
      %p65 = scmp.ne.s32.totalorder %s57, %s59
      %p66 = scmp.eq.s32.totalorder %s28, 1
      %p67 = por %p65, %p66
      %p68 = scmp.ne.s32.totalorder %s59, %s60
      %p69 = scmp.eq.s32.totalorder %s28, 0
      %p70 = por %p68, %p69
      %p71 = scmp.ne.s32.totalorder %s59, %s60
      %p72 = scmp.eq.s32.totalorder %s29, 1
      %p73 = por %p71, %p72
      %p75 = scmp.ne.s32.totalorder %s60, %s74
      %p76 = scmp.eq.s32.totalorder %s29, 0
      %p77 = por %p75, %p76
      %s79 = sadd.s32 %s78, 1
      %p82 = scmp.eq.s32.totalorder %s23, 1
      %p83 = scmp.ne.s32.totalorder %s78, %s80
      %p84 = scmp.eq.s32.totalorder %s23, 0
      %p85 = por %p83, %p84
      %p86 = scmp.ne.s32.totalorder %s78, %s80
      %p87 = scmp.eq.s32.totalorder %s28, 1
      %p88 = por %p86, %p87
      %p89 = scmp.ne.s32.totalorder %s80, %s81
      %p90 = scmp.eq.s32.totalorder %s28, 0
      %p91 = por %p89, %p90
      %p92 = scmp.ne.s32.totalorder %s80, %s81
      %p93 = scmp.eq.s32.totalorder %s29, 1
      %p94 = por %p92, %p93
      %p96 = scmp.ne.s32.totalorder %s81, %s95
      %p97 = scmp.eq.s32.totalorder %s29, 0
      %p98 = por %p96, %p97
      %s100 = sadd.s32 %s99, 1
      %p103 = scmp.eq.s32.totalorder %s23, 1
      %p104 = scmp.ne.s32.totalorder %s99, %s101
      %p105 = scmp.eq.s32.totalorder %s23, 0
      %p106 = por %p104, %p105
      %p107 = scmp.ne.s32.totalorder %s99, %s101
      %p108 = scmp.eq.s32.totalorder %s28, 1
      %p109 = por %p107, %p108
      %p110 = scmp.ne.s32.totalorder %s101, %s102
      %p111 = scmp.eq.s32.totalorder %s28, 0
      %p112 = por %p110, %p111
      %p113 = scmp.ne.s32.totalorder %s101, %s102
      %p114 = scmp.eq.s32.totalorder %s29, 1
      %p115 = por %p113, %p114
      %p117 = scmp.ne.s32.totalorder %s102, %s116
      %p118 = scmp.eq.s32.totalorder %s29, 0
      %p119 = por %p117, %p118
      %s121 = sadd.s32 %s120, 1
      %p124 = scmp.eq.s32.totalorder %s23, 1
      %p125 = scmp.ne.s32.totalorder %s120, %s122
      %p126 = scmp.eq.s32.totalorder %s23, 0
      %p127 = por %p125, %p126
      %p128 = scmp.ne.s32.totalorder %s120, %s122
      %p129 = scmp.eq.s32.totalorder %s28, 1
      %p130 = por %p128, %p129
      %p131 = scmp.ne.s32.totalorder %s122, %s123
      %p132 = scmp.eq.s32.totalorder %s28, 0
      %p133 = por %p131, %p132
      %p134 = scmp.ne.s32.totalorder %s122, %s123
      %p135 = scmp.eq.s32.totalorder %s29, 1
      %p136 = por %p134, %p135
      %p138 = scmp.ne.s32.totalorder %s123, %s137
      %p139 = scmp.eq.s32.totalorder %s29, 0
      %p140 = por %p138, %p139
      %s142 = sadd.s32 %s141, 1
      %p145 = scmp.eq.s32.totalorder %s23, 1
      %p146 = scmp.ne.s32.totalorder %s141, %s143
      %p147 = scmp.eq.s32.totalorder %s23, 0
      %p148 = por %p146, %p147
      %p149 = scmp.ne.s32.totalorder %s141, %s143
      %p150 = scmp.eq.s32.totalorder %s28, 1
      %p151 = por %p149, %p150
      %p152 = scmp.ne.s32.totalorder %s143, %s144
      %p153 = scmp.eq.s32.totalorder %s28, 0
      %p154 = por %p152, %p153
      %p155 = scmp.ne.s32.totalorder %s143, %s144
      %p156 = scmp.eq.s32.totalorder %s29, 1
      %p157 = por %p155, %p156
      %p159 = scmp.ne.s32.totalorder %s144, %s158
      %p160 = scmp.eq.s32.totalorder %s29, 0
      %p161 = por %p159, %p160
      %s163 = sadd.s32 %s162, 1
      %p166 = scmp.eq.s32.totalorder %s23, 1
      %p167 = scmp.ne.s32.totalorder %s162, %s164
      %p168 = scmp.eq.s32.totalorder %s23, 0
      %p169 = por %p167, %p168
      %p170 = scmp.ne.s32.totalorder %s162, %s164
      %p171 = scmp.eq.s32.totalorder %s28, 1
      %p172 = por %p170, %p171
      %p173 = scmp.ne.s32.totalorder %s164, %s165
      %p174 = scmp.eq.s32.totalorder %s28, 0
      %p175 = por %p173, %p174
      %p176 = scmp.ne.s32.totalorder %s164, %s165
      %p177 = scmp.eq.s32.totalorder %s29, 1
      %p178 = por %p176, %p177
      %p180 = scmp.ne.s32.totalorder %s165, %s179
      %p181 = scmp.eq.s32.totalorder %s29, 0
      %p182 = por %p180, %p181
      %s184 = sadd.s32 %s183, 1
      %p187 = scmp.eq.s32.totalorder %s23, 1
      %p188 = scmp.ne.s32.totalorder %s183, %s185
      %p189 = scmp.eq.s32.totalorder %s23, 0
      %p190 = por %p188, %p189
      %p191 = scmp.ne.s32.totalorder %s183, %s185
      %p192 = scmp.eq.s32.totalorder %s28, 1
      %p193 = por %p191, %p192
      %p194 = scmp.ne.s32.totalorder %s185, %s186
      %p195 = scmp.eq.s32.totalorder %s28, 0
      %p196 = por %p194, %p195
      %p197 = scmp.ne.s32.totalorder %s185, %s186
      %p198 = scmp.eq.s32.totalorder %s29, 1
      %p199 = por %p197, %p198
      %p201 = scmp.ne.s32.totalorder %s186, %s200
      %p202 = scmp.eq.s32.totalorder %s29, 0
      %p203 = por %p201, %p202
      %s205 = sadd.s32 %s204, 1
      %p208 = scmp.eq.s32.totalorder %s23, 1
      %p209 = scmp.ne.s32.totalorder %s204, %s206
      %p210 = scmp.eq.s32.totalorder %s23, 0
      %p211 = por %p209, %p210
      %p212 = scmp.ne.s32.totalorder %s204, %s206
      %p213 = scmp.eq.s32.totalorder %s28, 1
      %p214 = por %p212, %p213
      %p215 = scmp.ne.s32.totalorder %s206, %s207
      %p216 = scmp.eq.s32.totalorder %s28, 0
      %p217 = por %p215, %p216
      %p218 = scmp.ne.s32.totalorder %s206, %s207
      %p219 = scmp.eq.s32.totalorder %s29, 1
      %p220 = por %p218, %p219
      %p222 = scmp.ne.s32.totalorder %s207, %s221
      %p223 = scmp.eq.s32.totalorder %s29, 0
      %p224 = por %p222, %p223
      %s225 = ssub.s32 %s23, %s30
      %p226 = scmp.eq.s32.totalorder %s225, 0
      %s228 = sadd.s32 %s227, 1
      %s229 = scalar_select %p226, %s227, %s228
      %p232 = pneg %p226
      %p233 = scmp.eq.s32.totalorder %s23, 1
      %p234 = por %p232, %p233
      %p235 = scmp.ne.s32.totalorder %s227, %s230
      %p236 = scmp.eq.s32.totalorder %s23, 0
      %p237 = por %p235, %p236
      %p238 = scmp.ne.s32.totalorder %s227, %s230
      %p239 = scmp.eq.s32.totalorder %s28, 1
      %p240 = por %p238, %p239
      %p241 = scmp.ne.s32.totalorder %s230, %s231
      %p242 = scmp.eq.s32.totalorder %s28, 0
      %p243 = por %p241, %p242
      %p244 = scmp.ne.s32.totalorder %s230, %s231
      %p245 = scmp.eq.s32.totalorder %s29, 1
      %p246 = por %p244, %p245
      %p248 = scmp.ne.s32.totalorder %s231, %s247
      %p249 = scmp.eq.s32.totalorder %s29, 0
      %p250 = por %p248, %p249
      %p251 = scmp.le.s32.totalorder 1, %s23
      %p252 = scmp.lt.s32.totalorder %s23, 3
      %p253 = pnand %p251, %p252
      %p254 = pneg %p253
      // Predicated region
      $region9: #{tpu_custom_call.1} parent=5 // pred_check
        _
      $region10: #{tpu_custom_call.1} parent=5 // pred_check_branch
        %256 = sbr.rel (%p253) target = $region12
      $region11: #{tpu_custom_call.1} parent=5 // pred_region
        %s257 = ssub.s32 %s23, 1
        // Predicated region
        $region13: #{tpu_custom_call.1} parent=11 // pred_check
          %p258 = pneg %p70
        $region14: #{tpu_custom_call.1} parent=11 // pred_check_branch
          %260 = sbr.rel (%p258) target = $region16
        $region15: #{tpu_custom_call.1} parent=11 // pred_region
          %s262 = ssub.s32 3072, 3072
          %263 = vsyncadd [#allocation6], %s262
          %s264 = sshll.u32 [#allocation5], 4
          %s265 = int_to_ptr.vmem [resolvable:$true] %s264
          %270 = dma.hbm_to_vmem [thread:$0]  %s1, 3072, %s265, [#allocation6], 192, 192, 12
        $region16: #{tpu_custom_call.1} parent=11 // pred_fallthru
          _
        // Predicated region
        $region17: #{tpu_custom_call.1} parent=11 // pred_check
          %p271 = pneg %p91
        $region18: #{tpu_custom_call.1} parent=11 // pred_check_branch
          %273 = sbr.rel (%p271) target = $region20
        $region19: #{tpu_custom_call.1} parent=11 // pred_region
          _
        $region20: #{tpu_custom_call.1} parent=11 // pred_fallthru
          _
        // Predicated region
        $region21: #{tpu_custom_call.1} parent=11 // pred_check
          %p274 = pneg %p112
        $region22: #{tpu_custom_call.1} parent=11 // pred_check_branch
          %276 = sbr.rel (%p274) target = $region24
        $region23: #{tpu_custom_call.1} parent=11 // pred_region
          %s278 = ssub.s32 1024, 1024
          %279 = vsyncadd [#allocation6], %s278
          %s280 = sshll.u32 [#allocation7], 4
          %s281 = int_to_ptr.vmem [resolvable:$true] %s280
          %286 = dma.hbm_to_vmem [thread:$0]  %s3, 1024, %s281, [#allocation6], 64, 64, 4
        $region24: #{tpu_custom_call.1} parent=11 // pred_fallthru
          _
        // Predicated region
        $region25: #{tpu_custom_call.1} parent=11 // pred_check
          %p287 = pneg %p133
        $region26: #{tpu_custom_call.1} parent=11 // pred_check_branch
          %289 = sbr.rel (%p287) target = $region28
        $region27: #{tpu_custom_call.1} parent=11 // pred_region
          _
        $region28: #{tpu_custom_call.1} parent=11 // pred_fallthru
          _
        // Predicated region
        $region29: #{tpu_custom_call.1} parent=11 // pred_check
          %p290 = pneg %p154
        $region30: #{tpu_custom_call.1} parent=11 // pred_check_branch
          %292 = sbr.rel (%p290) target = $region32
        $region31: #{tpu_custom_call.1} parent=11 // pred_region
          %s294 = ssub.s32 2048, 2048
          %295 = vsyncadd [#allocation9], %s294
          %s296 = sshll.u32 [#allocation8], 4
          %s297 = int_to_ptr.vmem [resolvable:$true] %s296
          %302 = dma.hbm_to_vmem [thread:$0]  %s5, 2048, %s297, [#allocation9], 128, 128, 8
        $region32: #{tpu_custom_call.1} parent=11 // pred_fallthru
          _
        // Predicated region
        $region33: #{tpu_custom_call.1} parent=11 // pred_check
          %p303 = pneg %p175
        $region34: #{tpu_custom_call.1} parent=11 // pred_check_branch
          %305 = sbr.rel (%p303) target = $region36
        $region35: #{tpu_custom_call.1} parent=11 // pred_region
          _
        $region36: #{tpu_custom_call.1} parent=11 // pred_fallthru
          _
        // Predicated region
        $region37: #{tpu_custom_call.1} parent=11 // pred_check
          %p306 = pneg %p196
        $region38: #{tpu_custom_call.1} parent=11 // pred_check_branch
          %308 = sbr.rel (%p306) target = $region40
        $region39: #{tpu_custom_call.1} parent=11 // pred_region
          %s310 = ssub.s32 2048, 2048
          %311 = vsyncadd [#allocation9], %s310
          %s312 = sshll.u32 [#allocation10], 4
          %s313 = int_to_ptr.vmem [resolvable:$true] %s312
          %318 = dma.hbm_to_vmem [thread:$0]  %s7, 2048, %s313, [#allocation9], 64, 64, 4
        $region40: #{tpu_custom_call.1} parent=11 // pred_fallthru
          _
        // Predicated region
        $region41: #{tpu_custom_call.1} parent=11 // pred_check
          %p319 = pneg %p217
        $region42: #{tpu_custom_call.1} parent=11 // pred_check_branch
          %321 = sbr.rel (%p319) target = $region44
        $region43: #{tpu_custom_call.1} parent=11 // pred_region
          _
        $region44: #{tpu_custom_call.1} parent=11 // pred_fallthru
          _
      $region12: #{tpu_custom_call.1} parent=5 // pred_fallthru
        _
      %p322 = scmp.lt.s32.totalorder %s23, 2
      // Predicated region
      $region45: #{tpu_custom_call.1} parent=5 // pred_check
        %p323 = pneg %p322
      $region46: #{tpu_custom_call.1} parent=5 // pred_check_branch
        %325 = sbr.rel (%p323) target = $region48
      $region47: #{tpu_custom_call.1} parent=5 // pred_region
        // Predicated region
        $region49: #{tpu_custom_call.1} parent=47 // pred_check
          %p326 = pneg %p43
        $region50: #{tpu_custom_call.1} parent=47 // pred_check_branch
          %328 = sbr.rel (%p326) target = $region52
        $region51: #{tpu_custom_call.1} parent=47 // pred_region
          %s329 = sand.u32 %s33, 1
          %s330 = scalar_lea.sflag [#allocation3], %s329
          %s331 = sand.u32 %s33, 1
          %s332 = smul.addr %s331, 16
          %s333 = scalar_lea.vmem [#allocation2], %s332
          %s334 = smul.u32 2, %s23
          %s336 = ssub.s32 256, 256
          %337 = vsyncadd %s330, %s336
          %s338 = smul.addr %s334, 128
          %s339 = scalar_lea.hbm %s0, %s338
          %s340 = sshll.u32 %s333, 4
          %s341 = int_to_ptr.vmem [resolvable:$true] %s340
          %346 = dma.hbm_to_vmem [thread:$0]  %s339, 256, %s341, %s330, 128, 128, 8
        $region52: #{tpu_custom_call.1} parent=47 // pred_fallthru
          _
      $region48: #{tpu_custom_call.1} parent=5 // pred_fallthru
        _
      %p347 = scmp.le.s32.totalorder 1, %s23
      %p348 = scmp.lt.s32.totalorder %s23, 3
      %p349 = pnand %p347, %p348
      %p350 = pneg %p349
      // Predicated region
      $region53: #{tpu_custom_call.1} parent=5 // pred_check
        _
      $region54: #{tpu_custom_call.1} parent=5 // pred_check_branch
        %352 = sbr.rel (%p349) target = $region56
      $region55: #{tpu_custom_call.1} parent=5 // pred_region
        %s353 = ssub.s32 %s23, 1
        %s354 = sand.u32 %s36, 1
        %s355 = scalar_lea.sflag [#allocation3], %s354
        %s356 = sand.u32 %s36, 1
        %s357 = smul.addr %s356, 16
        %s358 = scalar_lea.vmem [#allocation2], %s357
        // Predicated region
        $region57: #{tpu_custom_call.1} parent=55 // pred_check
          %p359 = pneg %p49
        $region58: #{tpu_custom_call.1} parent=55 // pred_check_branch
          %361 = sbr.rel (%p359) target = $region60
        $region59: #{tpu_custom_call.1} parent=55 // pred_region
          %362 = dma.done %s355, 256
        $region60: #{tpu_custom_call.1} parent=55 // pred_fallthru
          _
        // Predicated region
        $region61: #{tpu_custom_call.1} parent=55 // pred_check
          %p363 = pneg %p70
        $region62: #{tpu_custom_call.1} parent=55 // pred_check_branch
          %365 = sbr.rel (%p363) target = $region64
        $region63: #{tpu_custom_call.1} parent=55 // pred_region
          %366 = dma.done [#allocation6], 3072
        $region64: #{tpu_custom_call.1} parent=55 // pred_fallthru
          _
        // Predicated region
        $region65: #{tpu_custom_call.1} parent=55 // pred_check
          %p367 = pneg %p112
        $region66: #{tpu_custom_call.1} parent=55 // pred_check_branch
          %369 = sbr.rel (%p367) target = $region68
        $region67: #{tpu_custom_call.1} parent=55 // pred_region
          %370 = dma.done [#allocation6], 1024
        $region68: #{tpu_custom_call.1} parent=55 // pred_fallthru
          _
        // Predicated region
        $region69: #{tpu_custom_call.1} parent=55 // pred_check
          %p371 = pneg %p154
        $region70: #{tpu_custom_call.1} parent=55 // pred_check_branch
          %373 = sbr.rel (%p371) target = $region72
        $region71: #{tpu_custom_call.1} parent=55 // pred_region
          %374 = dma.done [#allocation9], 2048
        $region72: #{tpu_custom_call.1} parent=55 // pred_fallthru
          _
        // Predicated region
        $region73: #{tpu_custom_call.1} parent=55 // pred_check
          %p375 = pneg %p196
        $region74: #{tpu_custom_call.1} parent=55 // pred_check_branch
          %377 = sbr.rel (%p375) target = $region76
        $region75: #{tpu_custom_call.1} parent=55 // pred_region
          %378 = dma.done [#allocation9], 2048
        $region76: #{tpu_custom_call.1} parent=55 // pred_fallthru
          _
        %s379 = sand.u32 %s36, 1
        %s380 = scalar_lea.sflag [#allocation3], %s379
        %s381 = sand.u32 %s36, 1
        %s382 = smul.addr %s381, 16
        %s383 = scalar_lea.vmem [#allocation2], %s382
        %p384 = pneg %p49
        %p385 = pneg %p46
        %p386 = pneg %p70
        %p387 = pneg %p67
        %p388 = pneg %p91
        %p389 = pneg %p88
        %p390 = pneg %p112
        %p391 = pneg %p109
        %p392 = pneg %p133
        %p393 = pneg %p130
        %p394 = pneg %p154
        %p395 = pneg %p151
        %p396 = pneg %p175
        %p397 = pneg %p172
        %p398 = pneg %p196
        %p399 = pneg %p193
        %p400 = pneg %p217
        %p401 = pneg %p214
        %p402 = pneg %p243
        %p403 = pneg %p240
        %s404 = sand.u32 %s230, 1
        %s405 = scalar_lea.sflag [#allocation4], %s404
        %s406 = sand.u32 %s230, 1
        %s407 = smul.addr %s406, 16
        %s408 = scalar_lea.vmem [#allocation11], %s407
        %s409 = smul.u32 2, %s28
        %s410 = smul.u32 2, %s28
        %v412 = vld [vmem:[%s358] sm:$0xff]
        %v413 = vld [vmem:[%s358 + $0x8] sm:$0xff]
        %v414 = vpack.c.bf16 %v413, %v412
        %v415 = vld [vmem:[#allocation5] sm:$0xff]
        %v416 = vld [vmem:[#allocation5 + $0x8] sm:$0xf]
        %v417 = vld [vmem:[#allocation5 + $0xc] sm:$0xff]
        %v418 = vld [vmem:[#allocation5 + $0x14] sm:$0xf]
        %v419 = vld [vmem:[#allocation5 + $0x18] sm:$0xff]
        %v420 = vld [vmem:[#allocation5 + $0x20] sm:$0xf]
        %v421 = vld [vmem:[#allocation5 + $0x24] sm:$0xff]
        %v422 = vld [vmem:[#allocation5 + $0x2c] sm:$0xf]
        %v423 = vld [vmem:[#allocation5 + $0x30] sm:$0xff]
        %v424 = vld [vmem:[#allocation5 + $0x38] sm:$0xf]
        %v425 = vld [vmem:[#allocation5 + $0x3c] sm:$0xff]
        %v426 = vld [vmem:[#allocation5 + $0x44] sm:$0xf]
        %v427 = vld [vmem:[#allocation5 + $0x48] sm:$0xff]
        %v428 = vld [vmem:[#allocation5 + $0x50] sm:$0xf]
        %v429 = vld [vmem:[#allocation5 + $0x54] sm:$0xff]
        %v430 = vld [vmem:[#allocation5 + $0x5c] sm:$0xf]
        %v431 = vld [vmem:[#allocation5 + $0x60] sm:$0xff]
        %v432 = vld [vmem:[#allocation5 + $0x68] sm:$0xf]
        %v433 = vld [vmem:[#allocation5 + $0x6c] sm:$0xff]
        %v434 = vld [vmem:[#allocation5 + $0x74] sm:$0xf]
        %v435 = vld [vmem:[#allocation5 + $0x78] sm:$0xff]
        %v436 = vld [vmem:[#allocation5 + $0x80] sm:$0xf]
        %v437 = vld [vmem:[#allocation5 + $0x84] sm:$0xff]
        %v438 = vld [vmem:[#allocation5 + $0x8c] sm:$0xf]
        %v439 = vld [vmem:[#allocation5 + $0x90] sm:$0xff]
        %v440 = vld [vmem:[#allocation5 + $0x98] sm:$0xf]
        %v441 = vld [vmem:[#allocation5 + $0x9c] sm:$0xff]
        %v442 = vld [vmem:[#allocation5 + $0xa4] sm:$0xf]
        %v443 = vld [vmem:[#allocation5 + $0xa8] sm:$0xff]
        %v444 = vld [vmem:[#allocation5 + $0xb0] sm:$0xf]
        %v445 = vld [vmem:[#allocation5 + $0xb4] sm:$0xff]
        %v446 = vld [vmem:[#allocation5 + $0xbc] sm:$0xf]
        %v447 = vld [vmem:[%s2] sm:$0x7]
        %v449 = vlaneseq
        %v450 = vshrl.u32 %v449, 7
        %v451 = vsub.s32 0, %v450
        %v452 = vrot.slane %v447, %v451
        %v453 = vlaneseq
        %v454 = vshrl.u32 %v453, 7
        %v455 = vsub.s32 1, %v454
        %v456 = vrot.slane %v447, %v455
        %v457 = vlaneseq
        %v458 = vshrl.u32 %v457, 7
        %v459 = vsub.s32 2, %v458
        %v460 = vrot.slane %v447, %v459
        %v496 = vunpack.c.l.b16 %v415
        %v497 = vunpack.c.h.b16 %v415
        %v498 = vunpack.c.l.b16 %v416
        %v499 = vunpack.c.l.b16 %v417
        %v500 = vunpack.c.h.b16 %v417
        %v501 = vunpack.c.l.b16 %v418
        %v502 = vunpack.c.l.b16 %v419
        %v503 = vunpack.c.h.b16 %v419
        %v504 = vunpack.c.l.b16 %v420
        %v505 = vunpack.c.l.b16 %v421
        %v506 = vunpack.c.h.b16 %v421
        %v507 = vunpack.c.l.b16 %v422
        %v508 = vunpack.c.l.b16 %v423
        %v509 = vunpack.c.h.b16 %v423
        %v510 = vunpack.c.l.b16 %v424
        %v511 = vunpack.c.l.b16 %v425
        %v512 = vunpack.c.h.b16 %v425
        %v513 = vunpack.c.l.b16 %v426
        %v514 = vunpack.c.l.b16 %v427
        %v515 = vunpack.c.h.b16 %v427
        %v516 = vunpack.c.l.b16 %v428
        %v517 = vunpack.c.l.b16 %v429
        %v518 = vunpack.c.h.b16 %v429
        %v519 = vunpack.c.l.b16 %v430
        %v520 = vunpack.c.l.b16 %v431
        %v521 = vunpack.c.h.b16 %v431
        %v522 = vunpack.c.l.b16 %v432
        %v523 = vunpack.c.l.b16 %v433
        %v524 = vunpack.c.h.b16 %v433
        %v525 = vunpack.c.l.b16 %v434
        %v526 = vunpack.c.l.b16 %v435
        %v527 = vunpack.c.h.b16 %v435
        %v528 = vunpack.c.l.b16 %v436
        %v529 = vunpack.c.l.b16 %v437
        %v530 = vunpack.c.h.b16 %v437
        %v531 = vunpack.c.l.b16 %v438
        %v532 = vunpack.c.l.b16 %v439
        %v533 = vunpack.c.h.b16 %v439
        %v534 = vunpack.c.l.b16 %v440
        %v535 = vunpack.c.l.b16 %v441
        %v536 = vunpack.c.h.b16 %v441
        %v537 = vunpack.c.l.b16 %v442
        %v538 = vunpack.c.l.b16 %v443
        %v539 = vunpack.c.h.b16 %v443
        %v540 = vunpack.c.l.b16 %v444
        %v541 = vunpack.c.l.b16 %v445
        %v542 = vunpack.c.h.b16 %v445
        %v543 = vunpack.c.l.b16 %v446
        %v544 = vpack.c.b16 %v499, %v496
        %v545 = vpack.c.b16 %v500, %v497
        %v546 = vpack.c.b16 %v501, %v498
        %v547 = vpack.c.b16 %v505, %v502
        %v548 = vpack.c.b16 %v506, %v503
        %v549 = vpack.c.b16 %v507, %v504
        %v550 = vpack.c.b16 %v511, %v508
        %v551 = vpack.c.b16 %v512, %v509
        %v552 = vpack.c.b16 %v513, %v510
        %v553 = vpack.c.b16 %v517, %v514
        %v554 = vpack.c.b16 %v518, %v515
        %v555 = vpack.c.b16 %v519, %v516
        %v556 = vpack.c.b16 %v523, %v520
        %v557 = vpack.c.b16 %v524, %v521
        %v558 = vpack.c.b16 %v525, %v522
        %v559 = vpack.c.b16 %v529, %v526
        %v560 = vpack.c.b16 %v530, %v527
        %v561 = vpack.c.b16 %v531, %v528
        %v562 = vpack.c.b16 %v535, %v532
        %v563 = vpack.c.b16 %v536, %v533
        %v564 = vpack.c.b16 %v537, %v534
        %v565 = vpack.c.b16 %v541, %v538
        %v566 = vpack.c.b16 %v542, %v539
        %v567 = vpack.c.b16 %v543, %v540
        %592 = vmatprep.subr.bf16.mxu0 %v545
        %593 = vmatpush1.bf16.msra.mxu0 %v544
        %594 = vmatprep.subr.bf16.mxu0 %v548
        %595 = vmatpush1.bf16.msra.mxu0 %v547
        %596 = vmatprep.subr.bf16.mxu0 %v551
        %597 = vmatpush1.bf16.msra.mxu0 %v550
        %598 = vmatprep.subr.bf16.mxu0 %v554
        %599 = vmatpush1.bf16.msra.mxu0 %v553
        %600 = vmatprep.subr.bf16.mxu0 %v557
        %601 = vmatpush1.bf16.msra.mxu0 %v556
        %602 = vmatprep.subr.bf16.mxu0 %v560
        %603 = vmatpush1.bf16.msra.mxu0 %v559
        %604 = vmatprep.subr.bf16.mxu0 %v563
        %605 = vmatpush1.bf16.msra.mxu0 %v562
        %606 = vmatprep.subr.bf16.mxu0 %v566
        %607 = vmatpush1.bf16.msra.mxu0 %v565
        %608 = vmatprep.subr.bf16.mxu0 0
        %609 = vmatpush1.bf16.msra.mxu0 0
        %610 = vmatprep.subr.bf16.mxu0 0
        %611 = vmatpush1.bf16.msra.mxu0 0
        %612 = vmatprep.subr.bf16.mxu0 0
        %613 = vmatpush1.bf16.msra.mxu0 0
        %614 = vmatprep.subr.bf16.mxu0 0
        %615 = vmatpush1.bf16.msra.mxu0 0
        %616 = vmatprep.subr.bf16.mxu0 0
        %617 = vmatpush1.bf16.msra.mxu0 0
        %618 = vmatprep.subr.bf16.mxu0 0
        %619 = vmatpush1.bf16.msra.mxu0 0
        %620 = vmatprep.subr.bf16.mxu0 0
        %621 = vmatpush1.bf16.msra.mxu0 0
        %622 = vmatprep.subr.bf16.mxu0 0
        %623 = vmatpush1.bf16.msra.mxu0 0
        %624 = vmatprep.mubr.bf16.mxu0 0
        %625 = vmatmul.mubr.bf16.gmra.mrb[0].mxu0 %v414
        %v626 = vpop.f32.mrb[0].mxu0
        %v627 = vadd.f32 %v452, %v626
        %v628 = vpop.f32.mrb[0].mxu0
        %v629 = vadd.f32 %v456, %v628
        %v630 = vpop.f32.mrb[0].mxu0
        %v631 = vadd.f32 %v452, %v630
        %v632 = vpop.f32.mrb[0].mxu0
        %v633 = vadd.f32 %v456, %v632
        %634 = vdwg.mxu0
        %635 = vmatprep.subr.bf16.mxu0 0
        %636 = vmatpush1.bf16.msra.mxu0 %v546
        %637 = vmatprep.subr.bf16.mxu0 0
        %638 = vmatpush1.bf16.msra.mxu0 %v549
        %639 = vmatprep.subr.bf16.mxu0 0
        %640 = vmatpush1.bf16.msra.mxu0 %v552
        %641 = vmatprep.subr.bf16.mxu0 0
        %642 = vmatpush1.bf16.msra.mxu0 %v555
        %643 = vmatprep.subr.bf16.mxu0 0
        %644 = vmatpush1.bf16.msra.mxu0 %v558
        %645 = vmatprep.subr.bf16.mxu0 0
        %646 = vmatpush1.bf16.msra.mxu0 %v561
        %647 = vmatprep.subr.bf16.mxu0 0
        %648 = vmatpush1.bf16.msra.mxu0 %v564
        %649 = vmatprep.subr.bf16.mxu0 0
        %650 = vmatpush1.bf16.msra.mxu0 %v567
        %651 = vmatprep.subr.bf16.mxu0 0
        %652 = vmatpush1.bf16.msra.mxu0 0
        %653 = vmatprep.subr.bf16.mxu0 0
        %654 = vmatpush1.bf16.msra.mxu0 0
        %655 = vmatprep.subr.bf16.mxu0 0
        %656 = vmatpush1.bf16.msra.mxu0 0
        %657 = vmatprep.subr.bf16.mxu0 0
        %658 = vmatpush1.bf16.msra.mxu0 0
        %659 = vmatprep.subr.bf16.mxu0 0
        %660 = vmatpush1.bf16.msra.mxu0 0
        %661 = vmatprep.subr.bf16.mxu0 0
        %662 = vmatpush1.bf16.msra.mxu0 0
        %663 = vmatprep.subr.bf16.mxu0 0
        %664 = vmatpush1.bf16.msra.mxu0 0
        %665 = vmatprep.subr.bf16.mxu0 0
        %666 = vmatpush1.bf16.msra.mxu0 0
        %667 = vmatprep.mubr.bf16.mxu0 0
        %668 = vmatmul.mubr.bf16.gmra.mrb[0].mxu0 %v414
        %v669 = vpop.f32.mrb[0].mxu0
        %v670 = vadd.f32 %v460, %v669
        %v671 = vpop.f32.mrb[0].mxu0
        %v672 = vpop.f32.mrb[0].mxu0
        %v673 = vadd.f32 %v460, %v672
        %v674 = vpop.f32.mrb[0].mxu0
        %675 = vdwg.mxu0
        %vm676 = vcmask 261120
        %v678 = vsel %vm676, %v627, 0
        %v681 = vsel %vm676, %v629, 0
        %683 = vmatprep.subr.mxu0 0.0
        %684 = vmatpush1.xpose.msra.mxu0 %v681
        %685 = vmatprep.subr.mxu0 0.0
        %686 = vmatpush1.xpose.msra.mxu0 0.0
        %687 = vmatprep.subr.mxu0 0.0
        %688 = vmatpush1.xpose.msra.mxu0 0.0
        %689 = vmatprep.subr.mxu0 0.0
        %690 = vmatpush1.xpose.msra.mxu0 0.0
        %691 = vmatprep.subr.mxu0 0.0
        %692 = vmatpush1.xpose.msra.mxu0 0.0
        %693 = vmatprep.subr.mxu0 0.0
        %694 = vmatpush1.xpose.msra.mxu0 0.0
        %695 = vmatprep.subr.mxu0 0.0
        %696 = vmatpush1.xpose.msra.mxu0 0.0
        %697 = vmatprep.subr.mxu0 0.0
        %698 = vmatpush1.xpose.msra.mxu0 0.0
        %699 = vmatprep.subr.mxu0 0.0
        %700 = vmatpush1.xpose.msra.mxu0 0.0
        %701 = vmatprep.subr.mxu0 0.0
        %702 = vmatpush1.xpose.msra.mxu0 0.0
        %703 = vmatprep.subr.mxu0 0.0
        %704 = vmatpush1.xpose.msra.mxu0 0.0
        %705 = vmatprep.subr.mxu0 0.0
        %706 = vmatpush1.xpose.msra.mxu0 0.0
        %707 = vmatprep.subr.mxu0 0.0
        %708 = vmatpush1.xpose.msra.mxu0 0.0
        %709 = vmatprep.subr.mxu0 0.0
        %710 = vmatpush1.xpose.msra.mxu0 0.0
        %711 = vmatprep.subr.mxu0 0.0
        %712 = vmatpush1.xpose.msra.mxu0 0.0
        %713 = vmatprep.subr.mxu0 0.0
        %714 = vmatpush1.xpose.msra.mxu0 0.0
        %715 = vmatprep.subr.mxu0 0.0
        %716 = vmatpush1.xpose.msra.mxu0 0.0
        %717 = vmatprep.subr.mxu0 0.0
        %718 = vmatpush1.xpose.msra.mxu0 0.0
        %719 = vmatprep.subr.mxu0 0.0
        %720 = vmatpush1.xpose.msra.mxu0 0.0
        %721 = vmatprep.subr.mxu0 0.0
        %722 = vmatpush1.xpose.msra.mxu0 0.0
        %723 = vmatprep.subr.mxu0 0.0
        %724 = vmatpush1.xpose.msra.mxu0 0.0
        %725 = vmatprep.subr.mxu0 0.0
        %726 = vmatpush1.xpose.msra.mxu0 0.0
        %727 = vmatprep.subr.mxu0 0.0
        %728 = vmatpush1.xpose.msra.mxu0 0.0
        %729 = vmatprep.subr.mxu0 0.0
        %730 = vmatpush1.xpose.msra.mxu0 0.0
        %731 = vmatprep.subr.mxu0 0.0
        %732 = vmatpush1.xpose.msra.mxu0 0.0
        %733 = vmatprep.subr.mxu0 0.0
        %734 = vmatpush1.xpose.msra.mxu0 0.0
        %735 = vmatprep.subr.mxu0 0.0
        %736 = vmatpush1.xpose.msra.mxu0 0.0
        %737 = vmatprep.subr.mxu0 0.0
        %738 = vmatpush1.xpose.msra.mxu0 0.0
        %739 = vmatprep.subr.mxu0 0.0
        %740 = vmatpush1.xpose.msra.mxu0 0.0
        %741 = vmatprep.subr.mxu0 0.0
        %742 = vmatpush1.xpose.msra.mxu0 0.0
        %743 = vmatprep.subr.mxu0 0.0
        %744 = vmatpush1.xpose.msra.mxu0 0.0
        %745 = vmatprep.subr.mxu0 0.0
        %746 = vmatpush1.xpose.msra.mxu0 0.0
        %747 = vmatprep.mubr.f32.mxu0 0.0
        %748 = vmatmul.mubr.f32.gmra.mrb[0].mxu0 %v678
        %v749 = vpop.f32.mrb[0].mxu0
        %v750 = vadd.f32 0.0, %v749
        %v751 = vpop.f32.mrb[0].mxu0
        %752 = vdwg.mxu0
        %v754 = vsel %vm676, %v631, 0
        %v757 = vsel %vm676, %v633, 0
        %759 = vmatprep.subr.mxu0 0.0
        %760 = vmatpush1.xpose.msra.mxu0 %v757
        %761 = vmatprep.subr.mxu0 0.0
        %762 = vmatpush1.xpose.msra.mxu0 0.0
        %763 = vmatprep.subr.mxu0 0.0
        %764 = vmatpush1.xpose.msra.mxu0 0.0
        %765 = vmatprep.subr.mxu0 0.0
        %766 = vmatpush1.xpose.msra.mxu0 0.0
        %767 = vmatprep.subr.mxu0 0.0
        %768 = vmatpush1.xpose.msra.mxu0 0.0
        %769 = vmatprep.subr.mxu0 0.0
        %770 = vmatpush1.xpose.msra.mxu0 0.0
        %771 = vmatprep.subr.mxu0 0.0
        %772 = vmatpush1.xpose.msra.mxu0 0.0
        %773 = vmatprep.subr.mxu0 0.0
        %774 = vmatpush1.xpose.msra.mxu0 0.0
        %775 = vmatprep.subr.mxu0 0.0
        %776 = vmatpush1.xpose.msra.mxu0 0.0
        %777 = vmatprep.subr.mxu0 0.0
        %778 = vmatpush1.xpose.msra.mxu0 0.0
        %779 = vmatprep.subr.mxu0 0.0
        %780 = vmatpush1.xpose.msra.mxu0 0.0
        %781 = vmatprep.subr.mxu0 0.0
        %782 = vmatpush1.xpose.msra.mxu0 0.0
        %783 = vmatprep.subr.mxu0 0.0
        %784 = vmatpush1.xpose.msra.mxu0 0.0
        %785 = vmatprep.subr.mxu0 0.0
        %786 = vmatpush1.xpose.msra.mxu0 0.0
        %787 = vmatprep.subr.mxu0 0.0
        %788 = vmatpush1.xpose.msra.mxu0 0.0
        %789 = vmatprep.subr.mxu0 0.0
        %790 = vmatpush1.xpose.msra.mxu0 0.0
        %791 = vmatprep.subr.mxu0 0.0
        %792 = vmatpush1.xpose.msra.mxu0 0.0
        %793 = vmatprep.subr.mxu0 0.0
        %794 = vmatpush1.xpose.msra.mxu0 0.0
        %795 = vmatprep.subr.mxu0 0.0
        %796 = vmatpush1.xpose.msra.mxu0 0.0
        %797 = vmatprep.subr.mxu0 0.0
        %798 = vmatpush1.xpose.msra.mxu0 0.0
        %799 = vmatprep.subr.mxu0 0.0
        %800 = vmatpush1.xpose.msra.mxu0 0.0
        %801 = vmatprep.subr.mxu0 0.0
        %802 = vmatpush1.xpose.msra.mxu0 0.0
        %803 = vmatprep.subr.mxu0 0.0
        %804 = vmatpush1.xpose.msra.mxu0 0.0
        %805 = vmatprep.subr.mxu0 0.0
        %806 = vmatpush1.xpose.msra.mxu0 0.0
        %807 = vmatprep.subr.mxu0 0.0
        %808 = vmatpush1.xpose.msra.mxu0 0.0
        %809 = vmatprep.subr.mxu0 0.0
        %810 = vmatpush1.xpose.msra.mxu0 0.0
        %811 = vmatprep.subr.mxu0 0.0
        %812 = vmatpush1.xpose.msra.mxu0 0.0
        %813 = vmatprep.subr.mxu0 0.0
        %814 = vmatpush1.xpose.msra.mxu0 0.0
        %815 = vmatprep.subr.mxu0 0.0
        %816 = vmatpush1.xpose.msra.mxu0 0.0
        %817 = vmatprep.subr.mxu0 0.0
        %818 = vmatpush1.xpose.msra.mxu0 0.0
        %819 = vmatprep.subr.mxu0 0.0
        %820 = vmatpush1.xpose.msra.mxu0 0.0
        %821 = vmatprep.subr.mxu0 0.0
        %822 = vmatpush1.xpose.msra.mxu0 0.0
        %823 = vmatprep.mubr.f32.mxu0 0.0
        %824 = vmatmul.mubr.f32.gmra.mrb[0].mxu0 %v754
        %v825 = vpop.f32.mrb[0].mxu0
        %v826 = vadd.f32 0.0, %v825
        %v827 = vpop.f32.mrb[0].mxu0
        %828 = vdwg.mxu0
        %vm829 = vcmask 64512
        %v830 = vsel %vm829, %v750, -inf
        %831 = vmax.xlane.f32.xlu0 %v830
        %v832 = vpop.xlane.xlu0 %831
        %v833 = vsel %vm829, %v826, -inf
        %834 = vmax.xlane.f32.xlu0 %v833
        %v835 = vpop.xlane.xlu0 %834
        %v836 = vsub.f32 %v750, %v832
        %v837 = vsub.f32 %v826, %v835
        %v838 = vmul.f32 %v836, 1.442695
        %v839 = vpow.pop %v838
        %v840 = vmul.f32 %v837, 1.442695
        %v841 = vpow.pop %v840
        %v842 = vsel %vm829, %v839, 0.0
        %843 = vadd.xlane.f32.xlu0 %v842
        %v844 = vpop.xlane.xlu0 %843
        %v845 = vsel %vm829, %v841, 0.0
        %846 = vadd.xlane.f32.xlu0 %v845
        %v847 = vpop.xlane.xlu0 %846
        %v848 = vrcp.pop %v844
        %v849 = vrcp.pop %v847
        %v850 = vmul.f32 %v839, %v848
        %v851 = vmul.f32 %v841, %v849
        %v853 = vsel %vm829, %v850, 0
        %855 = vmatprep.subr.mxu0 0.0
        %856 = vmatpush1.msra.mxu0 %v670
        %857 = vmatprep.subr.mxu0 0.0
        %858 = vmatpush1.msra.mxu0 0.0
        %859 = vmatprep.subr.mxu0 0.0
        %860 = vmatpush1.msra.mxu0 0.0
        %861 = vmatprep.subr.mxu0 0.0
        %862 = vmatpush1.msra.mxu0 0.0
        %863 = vmatprep.subr.mxu0 0.0
        %864 = vmatpush1.msra.mxu0 0.0
        %865 = vmatprep.subr.mxu0 0.0
        %866 = vmatpush1.msra.mxu0 0.0
        %867 = vmatprep.subr.mxu0 0.0
        %868 = vmatpush1.msra.mxu0 0.0
        %869 = vmatprep.subr.mxu0 0.0
        %870 = vmatpush1.msra.mxu0 0.0
        %871 = vmatprep.subr.mxu0 0.0
        %872 = vmatpush1.msra.mxu0 0.0
        %873 = vmatprep.subr.mxu0 0.0
        %874 = vmatpush1.msra.mxu0 0.0
        %875 = vmatprep.subr.mxu0 0.0
        %876 = vmatpush1.msra.mxu0 0.0
        %877 = vmatprep.subr.mxu0 0.0
        %878 = vmatpush1.msra.mxu0 0.0
        %879 = vmatprep.subr.mxu0 0.0
        %880 = vmatpush1.msra.mxu0 0.0
        %881 = vmatprep.subr.mxu0 0.0
        %882 = vmatpush1.msra.mxu0 0.0
        %883 = vmatprep.subr.mxu0 0.0
        %884 = vmatpush1.msra.mxu0 0.0
        %885 = vmatprep.subr.mxu0 0.0
        %886 = vmatpush1.msra.mxu0 0.0
        %887 = vmatprep.subr.mxu0 0.0
        %888 = vmatpush1.msra.mxu0 0.0
        %889 = vmatprep.subr.mxu0 0.0
        %890 = vmatpush1.msra.mxu0 0.0
        %891 = vmatprep.subr.mxu0 0.0
        %892 = vmatpush1.msra.mxu0 0.0
        %893 = vmatprep.subr.mxu0 0.0
        %894 = vmatpush1.msra.mxu0 0.0
        %895 = vmatprep.subr.mxu0 0.0
        %896 = vmatpush1.msra.mxu0 0.0
        %897 = vmatprep.subr.mxu0 0.0
        %898 = vmatpush1.msra.mxu0 0.0
        %899 = vmatprep.subr.mxu0 0.0
        %900 = vmatpush1.msra.mxu0 0.0
        %901 = vmatprep.subr.mxu0 0.0
        %902 = vmatpush1.msra.mxu0 0.0
        %903 = vmatprep.subr.mxu0 0.0
        %904 = vmatpush1.msra.mxu0 0.0
        %905 = vmatprep.subr.mxu0 0.0
        %906 = vmatpush1.msra.mxu0 0.0
        %907 = vmatprep.subr.mxu0 0.0
        %908 = vmatpush1.msra.mxu0 0.0
        %909 = vmatprep.subr.mxu0 0.0
        %910 = vmatpush1.msra.mxu0 0.0
        %911 = vmatprep.subr.mxu0 0.0
        %912 = vmatpush1.msra.mxu0 0.0
        %913 = vmatprep.subr.mxu0 0.0
        %914 = vmatpush1.msra.mxu0 0.0
        %915 = vmatprep.subr.mxu0 0.0
        %916 = vmatpush1.msra.mxu0 0.0
        %917 = vmatprep.subr.mxu0 0.0
        %918 = vmatpush1.msra.mxu0 0.0
        %919 = vmatprep.mubr.f32.mxu0 0.0
        %920 = vmatmul.mubr.f32.gmra.mrb[0].mxu0 %v853
        %v921 = vpop.f32.mrb[0].mxu0
        %v922 = vadd.f32 0.0, %v921
        %v923 = vpop.f32.mrb[0].mxu0
        %924 = vdwg.mxu0
        %v926 = vsel %vm829, %v851, 0
        %928 = vmatprep.subr.mxu0 0.0
        %929 = vmatpush1.msra.mxu0 %v673
        %930 = vmatprep.subr.mxu0 0.0
        %931 = vmatpush1.msra.mxu0 0.0
        %932 = vmatprep.subr.mxu0 0.0
        %933 = vmatpush1.msra.mxu0 0.0
        %934 = vmatprep.subr.mxu0 0.0
        %935 = vmatpush1.msra.mxu0 0.0
        %936 = vmatprep.subr.mxu0 0.0
        %937 = vmatpush1.msra.mxu0 0.0
        %938 = vmatprep.subr.mxu0 0.0
        %939 = vmatpush1.msra.mxu0 0.0
        %940 = vmatprep.subr.mxu0 0.0
        %941 = vmatpush1.msra.mxu0 0.0
        %942 = vmatprep.subr.mxu0 0.0
        %943 = vmatpush1.msra.mxu0 0.0
        %944 = vmatprep.subr.mxu0 0.0
        %945 = vmatpush1.msra.mxu0 0.0
        %946 = vmatprep.subr.mxu0 0.0
        %947 = vmatpush1.msra.mxu0 0.0
        %948 = vmatprep.subr.mxu0 0.0
        %949 = vmatpush1.msra.mxu0 0.0
        %950 = vmatprep.subr.mxu0 0.0
        %951 = vmatpush1.msra.mxu0 0.0
        %952 = vmatprep.subr.mxu0 0.0
        %953 = vmatpush1.msra.mxu0 0.0
        %954 = vmatprep.subr.mxu0 0.0
        %955 = vmatpush1.msra.mxu0 0.0
        %956 = vmatprep.subr.mxu0 0.0
        %957 = vmatpush1.msra.mxu0 0.0
        %958 = vmatprep.subr.mxu0 0.0
        %959 = vmatpush1.msra.mxu0 0.0
        %960 = vmatprep.subr.mxu0 0.0
        %961 = vmatpush1.msra.mxu0 0.0
        %962 = vmatprep.subr.mxu0 0.0
        %963 = vmatpush1.msra.mxu0 0.0
        %964 = vmatprep.subr.mxu0 0.0
        %965 = vmatpush1.msra.mxu0 0.0
        %966 = vmatprep.subr.mxu0 0.0
        %967 = vmatpush1.msra.mxu0 0.0
        %968 = vmatprep.subr.mxu0 0.0
        %969 = vmatpush1.msra.mxu0 0.0
        %970 = vmatprep.subr.mxu0 0.0
        %971 = vmatpush1.msra.mxu0 0.0
        %972 = vmatprep.subr.mxu0 0.0
        %973 = vmatpush1.msra.mxu0 0.0
        %974 = vmatprep.subr.mxu0 0.0
        %975 = vmatpush1.msra.mxu0 0.0
        %976 = vmatprep.subr.mxu0 0.0
        %977 = vmatpush1.msra.mxu0 0.0
        %978 = vmatprep.subr.mxu0 0.0
        %979 = vmatpush1.msra.mxu0 0.0
        %980 = vmatprep.subr.mxu0 0.0
        %981 = vmatpush1.msra.mxu0 0.0
        %982 = vmatprep.subr.mxu0 0.0
        %983 = vmatpush1.msra.mxu0 0.0
        %984 = vmatprep.subr.mxu0 0.0
        %985 = vmatpush1.msra.mxu0 0.0
        %986 = vmatprep.subr.mxu0 0.0
        %987 = vmatpush1.msra.mxu0 0.0
        %988 = vmatprep.subr.mxu0 0.0
        %989 = vmatpush1.msra.mxu0 0.0
        %990 = vmatprep.subr.mxu0 0.0
        %991 = vmatpush1.msra.mxu0 0.0
        %992 = vmatprep.mubr.f32.mxu0 0.0
        %993 = vmatmul.mubr.f32.gmra.mrb[0].mxu0 %v926
        %v994 = vpop.f32.mrb[0].mxu0
        %v995 = vadd.f32 0.0, %v994
        %v996 = vpop.f32.mrb[0].mxu0
        %997 = vdwg.mxu0
        %v998 = vpack.c.bf16 %v995, %v922
        %v999 = vld [vmem:[#allocation7] sm:$0xf]
        %v1000 = vld [vmem:[#allocation7 + $0x4] sm:$0xf]
        %v1001 = vld [vmem:[#allocation7 + $0x8] sm:$0xf]
        %v1002 = vld [vmem:[#allocation7 + $0xc] sm:$0xf]
        %1003 = vrot.lane.b32.xlu0 %v627, 96
        %v1004 = vpop.permute.xlu0 %1003
        %1005 = vrot.lane.b32.xlu0 %v629, 96
        %v1006 = vpop.permute.xlu0 %1005
        %v1007 = vsel %vm676, %v1004, 0
        %v1009 = vsel %vm676, %v1006, 0
        %1011 = vmatprep.subr.mxu0 0.0
        %1012 = vmatpush1.xpose.msra.mxu0 %v1009
        %1013 = vmatprep.subr.mxu0 0.0
        %1014 = vmatpush1.xpose.msra.mxu0 0.0
        %1015 = vmatprep.subr.mxu0 0.0
        %1016 = vmatpush1.xpose.msra.mxu0 0.0
        %1017 = vmatprep.subr.mxu0 0.0
        %1018 = vmatpush1.xpose.msra.mxu0 0.0
        %1019 = vmatprep.subr.mxu0 0.0
        %1020 = vmatpush1.xpose.msra.mxu0 0.0
        %1021 = vmatprep.subr.mxu0 0.0
        %1022 = vmatpush1.xpose.msra.mxu0 0.0
        %1023 = vmatprep.subr.mxu0 0.0
        %1024 = vmatpush1.xpose.msra.mxu0 0.0
        %1025 = vmatprep.subr.mxu0 0.0
        %1026 = vmatpush1.xpose.msra.mxu0 0.0
        %1027 = vmatprep.subr.mxu0 0.0
        %1028 = vmatpush1.xpose.msra.mxu0 0.0
        %1029 = vmatprep.subr.mxu0 0.0
        %1030 = vmatpush1.xpose.msra.mxu0 0.0
        %1031 = vmatprep.subr.mxu0 0.0
        %1032 = vmatpush1.xpose.msra.mxu0 0.0
        %1033 = vmatprep.subr.mxu0 0.0
        %1034 = vmatpush1.xpose.msra.mxu0 0.0
        %1035 = vmatprep.subr.mxu0 0.0
        %1036 = vmatpush1.xpose.msra.mxu0 0.0
        %1037 = vmatprep.subr.mxu0 0.0
        %1038 = vmatpush1.xpose.msra.mxu0 0.0
        %1039 = vmatprep.subr.mxu0 0.0
        %1040 = vmatpush1.xpose.msra.mxu0 0.0
        %1041 = vmatprep.subr.mxu0 0.0
        %1042 = vmatpush1.xpose.msra.mxu0 0.0
        %1043 = vmatprep.subr.mxu0 0.0
        %1044 = vmatpush1.xpose.msra.mxu0 0.0
        %1045 = vmatprep.subr.mxu0 0.0
        %1046 = vmatpush1.xpose.msra.mxu0 0.0
        %1047 = vmatprep.subr.mxu0 0.0
        %1048 = vmatpush1.xpose.msra.mxu0 0.0
        %1049 = vmatprep.subr.mxu0 0.0
        %1050 = vmatpush1.xpose.msra.mxu0 0.0
        %1051 = vmatprep.subr.mxu0 0.0
        %1052 = vmatpush1.xpose.msra.mxu0 0.0
        %1053 = vmatprep.subr.mxu0 0.0
        %1054 = vmatpush1.xpose.msra.mxu0 0.0
        %1055 = vmatprep.subr.mxu0 0.0
        %1056 = vmatpush1.xpose.msra.mxu0 0.0
        %1057 = vmatprep.subr.mxu0 0.0
        %1058 = vmatpush1.xpose.msra.mxu0 0.0
        %1059 = vmatprep.subr.mxu0 0.0
        %1060 = vmatpush1.xpose.msra.mxu0 0.0
        %1061 = vmatprep.subr.mxu0 0.0
        %1062 = vmatpush1.xpose.msra.mxu0 0.0
        %1063 = vmatprep.subr.mxu0 0.0
        %1064 = vmatpush1.xpose.msra.mxu0 0.0
        %1065 = vmatprep.subr.mxu0 0.0
        %1066 = vmatpush1.xpose.msra.mxu0 0.0
        %1067 = vmatprep.subr.mxu0 0.0
        %1068 = vmatpush1.xpose.msra.mxu0 0.0
        %1069 = vmatprep.subr.mxu0 0.0
        %1070 = vmatpush1.xpose.msra.mxu0 0.0
        %1071 = vmatprep.subr.mxu0 0.0
        %1072 = vmatpush1.xpose.msra.mxu0 0.0
        %1073 = vmatprep.subr.mxu0 0.0
        %1074 = vmatpush1.xpose.msra.mxu0 0.0
        %1075 = vmatprep.mubr.f32.mxu0 0.0
        %1076 = vmatmul.mubr.f32.gmra.mrb[0].mxu0 %v1007
        %v1077 = vpop.f32.mrb[0].mxu0
        %v1078 = vadd.f32 0.0, %v1077
        %v1079 = vpop.f32.mrb[0].mxu0
        %1080 = vdwg.mxu0
        %1081 = vrot.lane.b32.xlu0 %v631, 96
        %v1082 = vpop.permute.xlu0 %1081
        %1083 = vrot.lane.b32.xlu0 %v633, 96
        %v1084 = vpop.permute.xlu0 %1083
        %v1085 = vsel %vm676, %v1082, 0
        %v1087 = vsel %vm676, %v1084, 0
        %1089 = vmatprep.subr.mxu0 0.0
        %1090 = vmatpush1.xpose.msra.mxu0 %v1087
        %1091 = vmatprep.subr.mxu0 0.0
        %1092 = vmatpush1.xpose.msra.mxu0 0.0
        %1093 = vmatprep.subr.mxu0 0.0
        %1094 = vmatpush1.xpose.msra.mxu0 0.0
        %1095 = vmatprep.subr.mxu0 0.0
        %1096 = vmatpush1.xpose.msra.mxu0 0.0
        %1097 = vmatprep.subr.mxu0 0.0
        %1098 = vmatpush1.xpose.msra.mxu0 0.0
        %1099 = vmatprep.subr.mxu0 0.0
        %1100 = vmatpush1.xpose.msra.mxu0 0.0
        %1101 = vmatprep.subr.mxu0 0.0
        %1102 = vmatpush1.xpose.msra.mxu0 0.0
        %1103 = vmatprep.subr.mxu0 0.0
        %1104 = vmatpush1.xpose.msra.mxu0 0.0
        %1105 = vmatprep.subr.mxu0 0.0
        %1106 = vmatpush1.xpose.msra.mxu0 0.0
        %1107 = vmatprep.subr.mxu0 0.0
        %1108 = vmatpush1.xpose.msra.mxu0 0.0
        %1109 = vmatprep.subr.mxu0 0.0
        %1110 = vmatpush1.xpose.msra.mxu0 0.0
        %1111 = vmatprep.subr.mxu0 0.0
        %1112 = vmatpush1.xpose.msra.mxu0 0.0
        %1113 = vmatprep.subr.mxu0 0.0
        %1114 = vmatpush1.xpose.msra.mxu0 0.0
        %1115 = vmatprep.subr.mxu0 0.0
        %1116 = vmatpush1.xpose.msra.mxu0 0.0
        %1117 = vmatprep.subr.mxu0 0.0
        %1118 = vmatpush1.xpose.msra.mxu0 0.0
        %1119 = vmatprep.subr.mxu0 0.0
        %1120 = vmatpush1.xpose.msra.mxu0 0.0
        %1121 = vmatprep.subr.mxu0 0.0
        %1122 = vmatpush1.xpose.msra.mxu0 0.0
        %1123 = vmatprep.subr.mxu0 0.0
        %1124 = vmatpush1.xpose.msra.mxu0 0.0
        %1125 = vmatprep.subr.mxu0 0.0
        %1126 = vmatpush1.xpose.msra.mxu0 0.0
        %1127 = vmatprep.subr.mxu0 0.0
        %1128 = vmatpush1.xpose.msra.mxu0 0.0
        %1129 = vmatprep.subr.mxu0 0.0
        %1130 = vmatpush1.xpose.msra.mxu0 0.0
        %1131 = vmatprep.subr.mxu0 0.0
        %1132 = vmatpush1.xpose.msra.mxu0 0.0
        %1133 = vmatprep.subr.mxu0 0.0
        %1134 = vmatpush1.xpose.msra.mxu0 0.0
        %1135 = vmatprep.subr.mxu0 0.0
        %1136 = vmatpush1.xpose.msra.mxu0 0.0
        %1137 = vmatprep.subr.mxu0 0.0
        %1138 = vmatpush1.xpose.msra.mxu0 0.0
        %1139 = vmatprep.subr.mxu0 0.0
        %1140 = vmatpush1.xpose.msra.mxu0 0.0
        %1141 = vmatprep.subr.mxu0 0.0
        %1142 = vmatpush1.xpose.msra.mxu0 0.0
        %1143 = vmatprep.subr.mxu0 0.0
        %1144 = vmatpush1.xpose.msra.mxu0 0.0
        %1145 = vmatprep.subr.mxu0 0.0
        %1146 = vmatpush1.xpose.msra.mxu0 0.0
        %1147 = vmatprep.subr.mxu0 0.0
        %1148 = vmatpush1.xpose.msra.mxu0 0.0
        %1149 = vmatprep.subr.mxu0 0.0
        %1150 = vmatpush1.xpose.msra.mxu0 0.0
        %1151 = vmatprep.subr.mxu0 0.0
        %1152 = vmatpush1.xpose.msra.mxu0 0.0
        %1153 = vmatprep.mubr.f32.mxu0 0.0
        %1154 = vmatmul.mubr.f32.gmra.mrb[0].mxu0 %v1085
        %v1155 = vpop.f32.mrb[0].mxu0
        %v1156 = vadd.f32 0.0, %v1155
        %v1157 = vpop.f32.mrb[0].mxu0
        %1158 = vdwg.mxu0
        %v1159 = vsel %vm829, %v1078, -inf
        %1160 = vmax.xlane.f32.xlu0 %v1159
        %v1161 = vpop.xlane.xlu0 %1160
        %v1162 = vsel %vm829, %v1156, -inf
        %1163 = vmax.xlane.f32.xlu0 %v1162
        %v1164 = vpop.xlane.xlu0 %1163
        %v1165 = vsub.f32 %v1078, %v1161
        %v1166 = vsub.f32 %v1156, %v1164
        %v1167 = vmul.f32 %v1165, 1.442695
        %v1168 = vpow.pop %v1167
        %v1169 = vmul.f32 %v1166, 1.442695
        %v1170 = vpow.pop %v1169
        %v1171 = vsel %vm829, %v1168, 0.0
        %1172 = vadd.xlane.f32.xlu0 %v1171
        %v1173 = vpop.xlane.xlu0 %1172
        %v1174 = vsel %vm829, %v1170, 0.0
        %1175 = vadd.xlane.f32.xlu0 %v1174
        %v1176 = vpop.xlane.xlu0 %1175
        %v1177 = vrcp.pop %v1173
        %v1178 = vrcp.pop %v1176
        %v1179 = vmul.f32 %v1168, %v1177
        %v1180 = vmul.f32 %v1170, %v1178
        %1182 = vrot.lane.b32.xlu0 %v670, 96
        %v1183 = vpop.permute.xlu0 %1182
        %v1186 = vsel %vm829, %v1179, 0
        %1188 = vmatprep.subr.mxu0 0.0
        %1189 = vmatpush1.msra.mxu0 %v1183
        %1190 = vmatprep.subr.mxu0 0.0
        %1191 = vmatpush1.msra.mxu0 0.0
        %1192 = vmatprep.subr.mxu0 0.0
        %1193 = vmatpush1.msra.mxu0 0.0
        %1194 = vmatprep.subr.mxu0 0.0
        %1195 = vmatpush1.msra.mxu0 0.0
        %1196 = vmatprep.subr.mxu0 0.0
        %1197 = vmatpush1.msra.mxu0 0.0
        %1198 = vmatprep.subr.mxu0 0.0
        %1199 = vmatpush1.msra.mxu0 0.0
        %1200 = vmatprep.subr.mxu0 0.0
        %1201 = vmatpush1.msra.mxu0 0.0
        %1202 = vmatprep.subr.mxu0 0.0
        %1203 = vmatpush1.msra.mxu0 0.0
        %1204 = vmatprep.subr.mxu0 0.0
        %1205 = vmatpush1.msra.mxu0 0.0
        %1206 = vmatprep.subr.mxu0 0.0
        %1207 = vmatpush1.msra.mxu0 0.0
        %1208 = vmatprep.subr.mxu0 0.0
        %1209 = vmatpush1.msra.mxu0 0.0
        %1210 = vmatprep.subr.mxu0 0.0
        %1211 = vmatpush1.msra.mxu0 0.0
        %1212 = vmatprep.subr.mxu0 0.0
        %1213 = vmatpush1.msra.mxu0 0.0
        %1214 = vmatprep.subr.mxu0 0.0
        %1215 = vmatpush1.msra.mxu0 0.0
        %1216 = vmatprep.subr.mxu0 0.0
        %1217 = vmatpush1.msra.mxu0 0.0
        %1218 = vmatprep.subr.mxu0 0.0
        %1219 = vmatpush1.msra.mxu0 0.0
        %1220 = vmatprep.subr.mxu0 0.0
        %1221 = vmatpush1.msra.mxu0 0.0
        %1222 = vmatprep.subr.mxu0 0.0
        %1223 = vmatpush1.msra.mxu0 0.0
        %1224 = vmatprep.subr.mxu0 0.0
        %1225 = vmatpush1.msra.mxu0 0.0
        %1226 = vmatprep.subr.mxu0 0.0
        %1227 = vmatpush1.msra.mxu0 0.0
        %1228 = vmatprep.subr.mxu0 0.0
        %1229 = vmatpush1.msra.mxu0 0.0
        %1230 = vmatprep.subr.mxu0 0.0
        %1231 = vmatpush1.msra.mxu0 0.0
        %1232 = vmatprep.subr.mxu0 0.0
        %1233 = vmatpush1.msra.mxu0 0.0
        %1234 = vmatprep.subr.mxu0 0.0
        %1235 = vmatpush1.msra.mxu0 0.0
        %1236 = vmatprep.subr.mxu0 0.0
        %1237 = vmatpush1.msra.mxu0 0.0
        %1238 = vmatprep.subr.mxu0 0.0
        %1239 = vmatpush1.msra.mxu0 0.0
        %1240 = vmatprep.subr.mxu0 0.0
        %1241 = vmatpush1.msra.mxu0 0.0
        %1242 = vmatprep.subr.mxu0 0.0
        %1243 = vmatpush1.msra.mxu0 0.0
        %1244 = vmatprep.subr.mxu0 0.0
        %1245 = vmatpush1.msra.mxu0 0.0
        %1246 = vmatprep.subr.mxu0 0.0
        %1247 = vmatpush1.msra.mxu0 0.0
        %1248 = vmatprep.subr.mxu0 0.0
        %1249 = vmatpush1.msra.mxu0 0.0
        %1250 = vmatprep.subr.mxu0 0.0
        %1251 = vmatpush1.msra.mxu0 0.0
        %1252 = vmatprep.mubr.f32.mxu0 0.0
        %1253 = vmatmul.mubr.f32.gmra.mrb[0].mxu0 %v1186
        %v1254 = vpop.f32.mrb[0].mxu0
        %v1255 = vadd.f32 0.0, %v1254
        %v1256 = vpop.f32.mrb[0].mxu0
        %1257 = vdwg.mxu0
        %1259 = vrot.lane.b32.xlu0 %v673, 96
        %v1260 = vpop.permute.xlu0 %1259
        %v1263 = vsel %vm829, %v1180, 0
        %1265 = vmatprep.subr.mxu0 0.0
        %1266 = vmatpush1.msra.mxu0 %v1260
        %1267 = vmatprep.subr.mxu0 0.0
        %1268 = vmatpush1.msra.mxu0 0.0
        %1269 = vmatprep.subr.mxu0 0.0
        %1270 = vmatpush1.msra.mxu0 0.0
        %1271 = vmatprep.subr.mxu0 0.0
        %1272 = vmatpush1.msra.mxu0 0.0
        %1273 = vmatprep.subr.mxu0 0.0
        %1274 = vmatpush1.msra.mxu0 0.0
        %1275 = vmatprep.subr.mxu0 0.0
        %1276 = vmatpush1.msra.mxu0 0.0
        %1277 = vmatprep.subr.mxu0 0.0
        %1278 = vmatpush1.msra.mxu0 0.0
        %1279 = vmatprep.subr.mxu0 0.0
        %1280 = vmatpush1.msra.mxu0 0.0
        %1281 = vmatprep.subr.mxu0 0.0
        %1282 = vmatpush1.msra.mxu0 0.0
        %1283 = vmatprep.subr.mxu0 0.0
        %1284 = vmatpush1.msra.mxu0 0.0
        %1285 = vmatprep.subr.mxu0 0.0
        %1286 = vmatpush1.msra.mxu0 0.0
        %1287 = vmatprep.subr.mxu0 0.0
        %1288 = vmatpush1.msra.mxu0 0.0
        %1289 = vmatprep.subr.mxu0 0.0
        %1290 = vmatpush1.msra.mxu0 0.0
        %1291 = vmatprep.subr.mxu0 0.0
        %1292 = vmatpush1.msra.mxu0 0.0
        %1293 = vmatprep.subr.mxu0 0.0
        %1294 = vmatpush1.msra.mxu0 0.0
        %1295 = vmatprep.subr.mxu0 0.0
        %1296 = vmatpush1.msra.mxu0 0.0
        %1297 = vmatprep.subr.mxu0 0.0
        %1298 = vmatpush1.msra.mxu0 0.0
        %1299 = vmatprep.subr.mxu0 0.0
        %1300 = vmatpush1.msra.mxu0 0.0
        %1301 = vmatprep.subr.mxu0 0.0
        %1302 = vmatpush1.msra.mxu0 0.0
        %1303 = vmatprep.subr.mxu0 0.0
        %1304 = vmatpush1.msra.mxu0 0.0
        %1305 = vmatprep.subr.mxu0 0.0
        %1306 = vmatpush1.msra.mxu0 0.0
        %1307 = vmatprep.subr.mxu0 0.0
        %1308 = vmatpush1.msra.mxu0 0.0
        %1309 = vmatprep.subr.mxu0 0.0
        %1310 = vmatpush1.msra.mxu0 0.0
        %1311 = vmatprep.subr.mxu0 0.0
        %1312 = vmatpush1.msra.mxu0 0.0
        %1313 = vmatprep.subr.mxu0 0.0
        %1314 = vmatpush1.msra.mxu0 0.0
        %1315 = vmatprep.subr.mxu0 0.0
        %1316 = vmatpush1.msra.mxu0 0.0
        %1317 = vmatprep.subr.mxu0 0.0
        %1318 = vmatpush1.msra.mxu0 0.0
        %1319 = vmatprep.subr.mxu0 0.0
        %1320 = vmatpush1.msra.mxu0 0.0
        %1321 = vmatprep.subr.mxu0 0.0
        %1322 = vmatpush1.msra.mxu0 0.0
        %1323 = vmatprep.subr.mxu0 0.0
        %1324 = vmatpush1.msra.mxu0 0.0
        %1325 = vmatprep.subr.mxu0 0.0
        %1326 = vmatpush1.msra.mxu0 0.0
        %1327 = vmatprep.subr.mxu0 0.0
        %1328 = vmatpush1.msra.mxu0 0.0
        %1329 = vmatprep.mubr.f32.mxu0 0.0
        %1330 = vmatmul.mubr.f32.gmra.mrb[0].mxu0 %v1263
        %v1331 = vpop.f32.mrb[0].mxu0
        %v1332 = vadd.f32 0.0, %v1331
        %v1333 = vpop.f32.mrb[0].mxu0
        %1334 = vdwg.mxu0
        %v1335 = vpack.c.bf16 %v1332, %v1255
        %s1336 = scalar_lea.vmem [#allocation7], 16
        %v1337 = vld [vmem:[%s1336] sm:$0xf]
        %v1338 = vld [vmem:[%s1336 + $0x4] sm:$0xf]
        %v1339 = vld [vmem:[%s1336 + $0x8] sm:$0xf]
        %v1340 = vld [vmem:[%s1336 + $0xc] sm:$0xf]
        %v1345 = vunpack.c.l.b16 %v1337
        %v1346 = vunpack.c.l.b16 %v1338
        %v1347 = vunpack.c.l.b16 %v1339
        %v1348 = vunpack.c.l.b16 %v1340
        %v1349 = vpack.c.b16 %v1346, %v1345
        %v1350 = vpack.c.b16 %v1348, %v1347
        %v1354 = vsel %vm676, %v1335, 0
        %1356 = vmatprep.subr.bf16.mxu0 0
        %1357 = vmatpush1.bf16.msra.mxu0 %v1349
        %1358 = vmatprep.subr.bf16.mxu0 0
        %1359 = vmatpush1.bf16.msra.mxu0 %v1350
        %1360 = vmatprep.subr.bf16.mxu0 0
        %1361 = vmatpush1.bf16.msra.mxu0 0
        %1362 = vmatprep.subr.bf16.mxu0 0
        %1363 = vmatpush1.bf16.msra.mxu0 0
        %1364 = vmatprep.subr.bf16.mxu0 0
        %1365 = vmatpush1.bf16.msra.mxu0 0
        %1366 = vmatprep.subr.bf16.mxu0 0
        %1367 = vmatpush1.bf16.msra.mxu0 0
        %1368 = vmatprep.subr.bf16.mxu0 0
        %1369 = vmatpush1.bf16.msra.mxu0 0
        %1370 = vmatprep.subr.bf16.mxu0 0
        %1371 = vmatpush1.bf16.msra.mxu0 0
        %1372 = vmatprep.subr.bf16.mxu0 0
        %1373 = vmatpush1.bf16.msra.mxu0 0
        %1374 = vmatprep.subr.bf16.mxu0 0
        %1375 = vmatpush1.bf16.msra.mxu0 0
        %1376 = vmatprep.subr.bf16.mxu0 0
        %1377 = vmatpush1.bf16.msra.mxu0 0
        %1378 = vmatprep.subr.bf16.mxu0 0
        %1379 = vmatpush1.bf16.msra.mxu0 0
        %1380 = vmatprep.subr.bf16.mxu0 0
        %1381 = vmatpush1.bf16.msra.mxu0 0
        %1382 = vmatprep.subr.bf16.mxu0 0
        %1383 = vmatpush1.bf16.msra.mxu0 0
        %1384 = vmatprep.subr.bf16.mxu0 0
        %1385 = vmatpush1.bf16.msra.mxu0 0
        %1386 = vmatprep.subr.bf16.mxu0 0
        %1387 = vmatpush1.bf16.msra.mxu0 0
        %1388 = vmatprep.mubr.bf16.mxu0 0
        %1389 = vmatmul.mubr.bf16.gmra.mrb[0].mxu0 %v1354
        %v1390 = vpop.f32.mrb[0].mxu0
        %v1391 = vadd.f32 0.0, %v1390
        %v1392 = vpop.f32.mrb[0].mxu0
        %v1393 = vpop.f32.mrb[0].mxu0
        %v1394 = vadd.f32 0.0, %v1393
        %v1395 = vpop.f32.mrb[0].mxu0
        %1396 = vdwg.mxu0
        %v1401 = vunpack.c.l.b16 %v999
        %v1402 = vunpack.c.l.b16 %v1000
        %v1403 = vunpack.c.l.b16 %v1001
        %v1404 = vunpack.c.l.b16 %v1002
        %v1405 = vpack.c.b16 %v1402, %v1401
        %v1406 = vpack.c.b16 %v1404, %v1403
        %v1410 = vsel %vm676, %v998, 0
        %1412 = vmatprep.subr.bf16.mxu0 0
        %1413 = vmatpush1.bf16.msra.mxu0 %v1405
        %1414 = vmatprep.subr.bf16.mxu0 0
        %1415 = vmatpush1.bf16.msra.mxu0 %v1406
        %1416 = vmatprep.subr.bf16.mxu0 0
        %1417 = vmatpush1.bf16.msra.mxu0 0
        %1418 = vmatprep.subr.bf16.mxu0 0
        %1419 = vmatpush1.bf16.msra.mxu0 0
        %1420 = vmatprep.subr.bf16.mxu0 0
        %1421 = vmatpush1.bf16.msra.mxu0 0
        %1422 = vmatprep.subr.bf16.mxu0 0
        %1423 = vmatpush1.bf16.msra.mxu0 0
        %1424 = vmatprep.subr.bf16.mxu0 0
        %1425 = vmatpush1.bf16.msra.mxu0 0
        %1426 = vmatprep.subr.bf16.mxu0 0
        %1427 = vmatpush1.bf16.msra.mxu0 0
        %1428 = vmatprep.subr.bf16.mxu0 0
        %1429 = vmatpush1.bf16.msra.mxu0 0
        %1430 = vmatprep.subr.bf16.mxu0 0
        %1431 = vmatpush1.bf16.msra.mxu0 0
        %1432 = vmatprep.subr.bf16.mxu0 0
        %1433 = vmatpush1.bf16.msra.mxu0 0
        %1434 = vmatprep.subr.bf16.mxu0 0
        %1435 = vmatpush1.bf16.msra.mxu0 0
        %1436 = vmatprep.subr.bf16.mxu0 0
        %1437 = vmatpush1.bf16.msra.mxu0 0
        %1438 = vmatprep.subr.bf16.mxu0 0
        %1439 = vmatpush1.bf16.msra.mxu0 0
        %1440 = vmatprep.subr.bf16.mxu0 0
        %1441 = vmatpush1.bf16.msra.mxu0 0
        %1442 = vmatprep.subr.bf16.mxu0 0
        %1443 = vmatpush1.bf16.msra.mxu0 0
        %1444 = vmatprep.mubr.bf16.mxu0 0
        %1445 = vmatmul.mubr.bf16.gmra.mrb[0].mxu0 %v1410
        %v1446 = vpop.f32.mrb[0].mxu0
        %v1447 = vadd.f32 %v1391, %v1446
        %v1448 = vpop.f32.mrb[0].mxu0
        %v1449 = vpop.f32.mrb[0].mxu0
        %v1450 = vadd.f32 %v1394, %v1449
        %v1451 = vpop.f32.mrb[0].mxu0
        %1452 = vdwg.mxu0
        %1453 = vrot.lane.b32.xlu0 %v627, 64
        %v1454 = vpop.permute.xlu0 %1453
        %1455 = vrot.lane.b32.xlu0 %v629, 64
        %v1456 = vpop.permute.xlu0 %1455
        %v1457 = vsel %vm676, %v1454, 0
        %v1459 = vsel %vm676, %v1456, 0
        %1461 = vmatprep.subr.mxu0 0.0
        %1462 = vmatpush1.xpose.msra.mxu0 %v1459
        %1463 = vmatprep.subr.mxu0 0.0
        %1464 = vmatpush1.xpose.msra.mxu0 0.0
        %1465 = vmatprep.subr.mxu0 0.0
        %1466 = vmatpush1.xpose.msra.mxu0 0.0
        %1467 = vmatprep.subr.mxu0 0.0
        %1468 = vmatpush1.xpose.msra.mxu0 0.0
        %1469 = vmatprep.subr.mxu0 0.0
        %1470 = vmatpush1.xpose.msra.mxu0 0.0
        %1471 = vmatprep.subr.mxu0 0.0
        %1472 = vmatpush1.xpose.msra.mxu0 0.0
        %1473 = vmatprep.subr.mxu0 0.0
        %1474 = vmatpush1.xpose.msra.mxu0 0.0
        %1475 = vmatprep.subr.mxu0 0.0
        %1476 = vmatpush1.xpose.msra.mxu0 0.0
        %1477 = vmatprep.subr.mxu0 0.0
        %1478 = vmatpush1.xpose.msra.mxu0 0.0
        %1479 = vmatprep.subr.mxu0 0.0
        %1480 = vmatpush1.xpose.msra.mxu0 0.0
        %1481 = vmatprep.subr.mxu0 0.0
        %1482 = vmatpush1.xpose.msra.mxu0 0.0
        %1483 = vmatprep.subr.mxu0 0.0
        %1484 = vmatpush1.xpose.msra.mxu0 0.0
        %1485 = vmatprep.subr.mxu0 0.0
        %1486 = vmatpush1.xpose.msra.mxu0 0.0
        %1487 = vmatprep.subr.mxu0 0.0
        %1488 = vmatpush1.xpose.msra.mxu0 0.0
        %1489 = vmatprep.subr.mxu0 0.0
        %1490 = vmatpush1.xpose.msra.mxu0 0.0
        %1491 = vmatprep.subr.mxu0 0.0
        %1492 = vmatpush1.xpose.msra.mxu0 0.0
        %1493 = vmatprep.subr.mxu0 0.0
        %1494 = vmatpush1.xpose.msra.mxu0 0.0
        %1495 = vmatprep.subr.mxu0 0.0
        %1496 = vmatpush1.xpose.msra.mxu0 0.0
        %1497 = vmatprep.subr.mxu0 0.0
        %1498 = vmatpush1.xpose.msra.mxu0 0.0
        %1499 = vmatprep.subr.mxu0 0.0
        %1500 = vmatpush1.xpose.msra.mxu0 0.0
        %1501 = vmatprep.subr.mxu0 0.0
        %1502 = vmatpush1.xpose.msra.mxu0 0.0
        %1503 = vmatprep.subr.mxu0 0.0
        %1504 = vmatpush1.xpose.msra.mxu0 0.0
        %1505 = vmatprep.subr.mxu0 0.0
        %1506 = vmatpush1.xpose.msra.mxu0 0.0
        %1507 = vmatprep.subr.mxu0 0.0
        %1508 = vmatpush1.xpose.msra.mxu0 0.0
        %1509 = vmatprep.subr.mxu0 0.0
        %1510 = vmatpush1.xpose.msra.mxu0 0.0
        %1511 = vmatprep.subr.mxu0 0.0
        %1512 = vmatpush1.xpose.msra.mxu0 0.0
        %1513 = vmatprep.subr.mxu0 0.0
        %1514 = vmatpush1.xpose.msra.mxu0 0.0
        %1515 = vmatprep.subr.mxu0 0.0
        %1516 = vmatpush1.xpose.msra.mxu0 0.0
        %1517 = vmatprep.subr.mxu0 0.0
        %1518 = vmatpush1.xpose.msra.mxu0 0.0
        %1519 = vmatprep.subr.mxu0 0.0
        %1520 = vmatpush1.xpose.msra.mxu0 0.0
        %1521 = vmatprep.subr.mxu0 0.0
        %1522 = vmatpush1.xpose.msra.mxu0 0.0
        %1523 = vmatprep.subr.mxu0 0.0
        %1524 = vmatpush1.xpose.msra.mxu0 0.0
        %1525 = vmatprep.mubr.f32.mxu0 0.0
        %1526 = vmatmul.mubr.f32.gmra.mrb[0].mxu0 %v1457
        %v1527 = vpop.f32.mrb[0].mxu0
        %v1528 = vadd.f32 0.0, %v1527
        %v1529 = vpop.f32.mrb[0].mxu0
        %1530 = vdwg.mxu0
        %1531 = vrot.lane.b32.xlu0 %v631, 64
        %v1532 = vpop.permute.xlu0 %1531
        %1533 = vrot.lane.b32.xlu0 %v633, 64
        %v1534 = vpop.permute.xlu0 %1533
        %v1535 = vsel %vm676, %v1532, 0
        %v1537 = vsel %vm676, %v1534, 0
        %1539 = vmatprep.subr.mxu0 0.0
        %1540 = vmatpush1.xpose.msra.mxu0 %v1537
        %1541 = vmatprep.subr.mxu0 0.0
        %1542 = vmatpush1.xpose.msra.mxu0 0.0
        %1543 = vmatprep.subr.mxu0 0.0
        %1544 = vmatpush1.xpose.msra.mxu0 0.0
        %1545 = vmatprep.subr.mxu0 0.0
        %1546 = vmatpush1.xpose.msra.mxu0 0.0
        %1547 = vmatprep.subr.mxu0 0.0
        %1548 = vmatpush1.xpose.msra.mxu0 0.0
        %1549 = vmatprep.subr.mxu0 0.0
        %1550 = vmatpush1.xpose.msra.mxu0 0.0
        %1551 = vmatprep.subr.mxu0 0.0
        %1552 = vmatpush1.xpose.msra.mxu0 0.0
        %1553 = vmatprep.subr.mxu0 0.0
        %1554 = vmatpush1.xpose.msra.mxu0 0.0
        %1555 = vmatprep.subr.mxu0 0.0
        %1556 = vmatpush1.xpose.msra.mxu0 0.0
        %1557 = vmatprep.subr.mxu0 0.0
        %1558 = vmatpush1.xpose.msra.mxu0 0.0
        %1559 = vmatprep.subr.mxu0 0.0
        %1560 = vmatpush1.xpose.msra.mxu0 0.0
        %1561 = vmatprep.subr.mxu0 0.0
        %1562 = vmatpush1.xpose.msra.mxu0 0.0
        %1563 = vmatprep.subr.mxu0 0.0
        %1564 = vmatpush1.xpose.msra.mxu0 0.0
        %1565 = vmatprep.subr.mxu0 0.0
        %1566 = vmatpush1.xpose.msra.mxu0 0.0
        %1567 = vmatprep.subr.mxu0 0.0
        %1568 = vmatpush1.xpose.msra.mxu0 0.0
        %1569 = vmatprep.subr.mxu0 0.0
        %1570 = vmatpush1.xpose.msra.mxu0 0.0
        %1571 = vmatprep.subr.mxu0 0.0
        %1572 = vmatpush1.xpose.msra.mxu0 0.0
        %1573 = vmatprep.subr.mxu0 0.0
        %1574 = vmatpush1.xpose.msra.mxu0 0.0
        %1575 = vmatprep.subr.mxu0 0.0
        %1576 = vmatpush1.xpose.msra.mxu0 0.0
        %1577 = vmatprep.subr.mxu0 0.0
        %1578 = vmatpush1.xpose.msra.mxu0 0.0
        %1579 = vmatprep.subr.mxu0 0.0
        %1580 = vmatpush1.xpose.msra.mxu0 0.0
        %1581 = vmatprep.subr.mxu0 0.0
        %1582 = vmatpush1.xpose.msra.mxu0 0.0
        %1583 = vmatprep.subr.mxu0 0.0
        %1584 = vmatpush1.xpose.msra.mxu0 0.0
        %1585 = vmatprep.subr.mxu0 0.0
        %1586 = vmatpush1.xpose.msra.mxu0 0.0
        %1587 = vmatprep.subr.mxu0 0.0
        %1588 = vmatpush1.xpose.msra.mxu0 0.0
        %1589 = vmatprep.subr.mxu0 0.0
        %1590 = vmatpush1.xpose.msra.mxu0 0.0
        %1591 = vmatprep.subr.mxu0 0.0
        %1592 = vmatpush1.xpose.msra.mxu0 0.0
        %1593 = vmatprep.subr.mxu0 0.0
        %1594 = vmatpush1.xpose.msra.mxu0 0.0
        %1595 = vmatprep.subr.mxu0 0.0
        %1596 = vmatpush1.xpose.msra.mxu0 0.0
        %1597 = vmatprep.subr.mxu0 0.0
        %1598 = vmatpush1.xpose.msra.mxu0 0.0
        %1599 = vmatprep.subr.mxu0 0.0
        %1600 = vmatpush1.xpose.msra.mxu0 0.0
        %1601 = vmatprep.subr.mxu0 0.0
        %1602 = vmatpush1.xpose.msra.mxu0 0.0
        %1603 = vmatprep.mubr.f32.mxu0 0.0
        %1604 = vmatmul.mubr.f32.gmra.mrb[0].mxu0 %v1535
        %v1605 = vpop.f32.mrb[0].mxu0
        %v1606 = vadd.f32 0.0, %v1605
        %v1607 = vpop.f32.mrb[0].mxu0
        %1608 = vdwg.mxu0
        %v1609 = vsel %vm829, %v1528, -inf
        %1610 = vmax.xlane.f32.xlu0 %v1609
        %v1611 = vpop.xlane.xlu0 %1610
        %v1612 = vsel %vm829, %v1606, -inf
        %1613 = vmax.xlane.f32.xlu0 %v1612
        %v1614 = vpop.xlane.xlu0 %1613
        %v1615 = vsub.f32 %v1528, %v1611
        %v1616 = vsub.f32 %v1606, %v1614
        %v1617 = vmul.f32 %v1615, 1.442695
        %v1618 = vpow.pop %v1617
        %v1619 = vmul.f32 %v1616, 1.442695
        %v1620 = vpow.pop %v1619
        %v1621 = vsel %vm829, %v1618, 0.0
        %1622 = vadd.xlane.f32.xlu0 %v1621
        %v1623 = vpop.xlane.xlu0 %1622
        %v1624 = vsel %vm829, %v1620, 0.0
        %1625 = vadd.xlane.f32.xlu0 %v1624
        %v1626 = vpop.xlane.xlu0 %1625
        %v1627 = vrcp.pop %v1623
        %v1628 = vrcp.pop %v1626
        %v1629 = vmul.f32 %v1618, %v1627
        %v1630 = vmul.f32 %v1620, %v1628
        %1631 = vrot.lane.b32.xlu0 %v670, 64
        %v1632 = vpop.permute.xlu0 %1631
        %v1635 = vsel %vm829, %v1629, 0
        %1637 = vmatprep.subr.mxu0 0.0
        %1638 = vmatpush1.msra.mxu0 %v1632
        %1639 = vmatprep.subr.mxu0 0.0
        %1640 = vmatpush1.msra.mxu0 0.0
        %1641 = vmatprep.subr.mxu0 0.0
        %1642 = vmatpush1.msra.mxu0 0.0
        %1643 = vmatprep.subr.mxu0 0.0
        %1644 = vmatpush1.msra.mxu0 0.0
        %1645 = vmatprep.subr.mxu0 0.0
        %1646 = vmatpush1.msra.mxu0 0.0
        %1647 = vmatprep.subr.mxu0 0.0
        %1648 = vmatpush1.msra.mxu0 0.0
        %1649 = vmatprep.subr.mxu0 0.0
        %1650 = vmatpush1.msra.mxu0 0.0
        %1651 = vmatprep.subr.mxu0 0.0
        %1652 = vmatpush1.msra.mxu0 0.0
        %1653 = vmatprep.subr.mxu0 0.0
        %1654 = vmatpush1.msra.mxu0 0.0
        %1655 = vmatprep.subr.mxu0 0.0
        %1656 = vmatpush1.msra.mxu0 0.0
        %1657 = vmatprep.subr.mxu0 0.0
        %1658 = vmatpush1.msra.mxu0 0.0
        %1659 = vmatprep.subr.mxu0 0.0
        %1660 = vmatpush1.msra.mxu0 0.0
        %1661 = vmatprep.subr.mxu0 0.0
        %1662 = vmatpush1.msra.mxu0 0.0
        %1663 = vmatprep.subr.mxu0 0.0
        %1664 = vmatpush1.msra.mxu0 0.0
        %1665 = vmatprep.subr.mxu0 0.0
        %1666 = vmatpush1.msra.mxu0 0.0
        %1667 = vmatprep.subr.mxu0 0.0
        %1668 = vmatpush1.msra.mxu0 0.0
        %1669 = vmatprep.subr.mxu0 0.0
        %1670 = vmatpush1.msra.mxu0 0.0
        %1671 = vmatprep.subr.mxu0 0.0
        %1672 = vmatpush1.msra.mxu0 0.0
        %1673 = vmatprep.subr.mxu0 0.0
        %1674 = vmatpush1.msra.mxu0 0.0
        %1675 = vmatprep.subr.mxu0 0.0
        %1676 = vmatpush1.msra.mxu0 0.0
        %1677 = vmatprep.subr.mxu0 0.0
        %1678 = vmatpush1.msra.mxu0 0.0
        %1679 = vmatprep.subr.mxu0 0.0
        %1680 = vmatpush1.msra.mxu0 0.0
        %1681 = vmatprep.subr.mxu0 0.0
        %1682 = vmatpush1.msra.mxu0 0.0
        %1683 = vmatprep.subr.mxu0 0.0
        %1684 = vmatpush1.msra.mxu0 0.0
        %1685 = vmatprep.subr.mxu0 0.0
        %1686 = vmatpush1.msra.mxu0 0.0
        %1687 = vmatprep.subr.mxu0 0.0
        %1688 = vmatpush1.msra.mxu0 0.0
        %1689 = vmatprep.subr.mxu0 0.0
        %1690 = vmatpush1.msra.mxu0 0.0
        %1691 = vmatprep.subr.mxu0 0.0
        %1692 = vmatpush1.msra.mxu0 0.0
        %1693 = vmatprep.subr.mxu0 0.0
        %1694 = vmatpush1.msra.mxu0 0.0
        %1695 = vmatprep.subr.mxu0 0.0
        %1696 = vmatpush1.msra.mxu0 0.0
        %1697 = vmatprep.subr.mxu0 0.0
        %1698 = vmatpush1.msra.mxu0 0.0
        %1699 = vmatprep.subr.mxu0 0.0
        %1700 = vmatpush1.msra.mxu0 0.0
        %1701 = vmatprep.mubr.f32.mxu0 0.0
        %1702 = vmatmul.mubr.f32.gmra.mrb[0].mxu0 %v1635
        %v1703 = vpop.f32.mrb[0].mxu0
        %v1704 = vadd.f32 0.0, %v1703
        %v1705 = vpop.f32.mrb[0].mxu0
        %1706 = vdwg.mxu0
        %1707 = vrot.lane.b32.xlu0 %v673, 64
        %v1708 = vpop.permute.xlu0 %1707
        %v1711 = vsel %vm829, %v1630, 0
        %1713 = vmatprep.subr.mxu0 0.0
        %1714 = vmatpush1.msra.mxu0 %v1708
        %1715 = vmatprep.subr.mxu0 0.0
        %1716 = vmatpush1.msra.mxu0 0.0
        %1717 = vmatprep.subr.mxu0 0.0
        %1718 = vmatpush1.msra.mxu0 0.0
        %1719 = vmatprep.subr.mxu0 0.0
        %1720 = vmatpush1.msra.mxu0 0.0
        %1721 = vmatprep.subr.mxu0 0.0
        %1722 = vmatpush1.msra.mxu0 0.0
        %1723 = vmatprep.subr.mxu0 0.0
        %1724 = vmatpush1.msra.mxu0 0.0
        %1725 = vmatprep.subr.mxu0 0.0
        %1726 = vmatpush1.msra.mxu0 0.0
        %1727 = vmatprep.subr.mxu0 0.0
        %1728 = vmatpush1.msra.mxu0 0.0
        %1729 = vmatprep.subr.mxu0 0.0
        %1730 = vmatpush1.msra.mxu0 0.0
        %1731 = vmatprep.subr.mxu0 0.0
        %1732 = vmatpush1.msra.mxu0 0.0
        %1733 = vmatprep.subr.mxu0 0.0
        %1734 = vmatpush1.msra.mxu0 0.0
        %1735 = vmatprep.subr.mxu0 0.0
        %1736 = vmatpush1.msra.mxu0 0.0
        %1737 = vmatprep.subr.mxu0 0.0
        %1738 = vmatpush1.msra.mxu0 0.0
        %1739 = vmatprep.subr.mxu0 0.0
        %1740 = vmatpush1.msra.mxu0 0.0
        %1741 = vmatprep.subr.mxu0 0.0
        %1742 = vmatpush1.msra.mxu0 0.0
        %1743 = vmatprep.subr.mxu0 0.0
        %1744 = vmatpush1.msra.mxu0 0.0
        %1745 = vmatprep.subr.mxu0 0.0
        %1746 = vmatpush1.msra.mxu0 0.0
        %1747 = vmatprep.subr.mxu0 0.0
        %1748 = vmatpush1.msra.mxu0 0.0
        %1749 = vmatprep.subr.mxu0 0.0
        %1750 = vmatpush1.msra.mxu0 0.0
        %1751 = vmatprep.subr.mxu0 0.0
        %1752 = vmatpush1.msra.mxu0 0.0
        %1753 = vmatprep.subr.mxu0 0.0
        %1754 = vmatpush1.msra.mxu0 0.0
        %1755 = vmatprep.subr.mxu0 0.0
        %1756 = vmatpush1.msra.mxu0 0.0
        %1757 = vmatprep.subr.mxu0 0.0
        %1758 = vmatpush1.msra.mxu0 0.0
        %1759 = vmatprep.subr.mxu0 0.0
        %1760 = vmatpush1.msra.mxu0 0.0
        %1761 = vmatprep.subr.mxu0 0.0
        %1762 = vmatpush1.msra.mxu0 0.0
        %1763 = vmatprep.subr.mxu0 0.0
        %1764 = vmatpush1.msra.mxu0 0.0
        %1765 = vmatprep.subr.mxu0 0.0
        %1766 = vmatpush1.msra.mxu0 0.0
        %1767 = vmatprep.subr.mxu0 0.0
        %1768 = vmatpush1.msra.mxu0 0.0
        %1769 = vmatprep.subr.mxu0 0.0
        %1770 = vmatpush1.msra.mxu0 0.0
        %1771 = vmatprep.subr.mxu0 0.0
        %1772 = vmatpush1.msra.mxu0 0.0
        %1773 = vmatprep.subr.mxu0 0.0
        %1774 = vmatpush1.msra.mxu0 0.0
        %1775 = vmatprep.subr.mxu0 0.0
        %1776 = vmatpush1.msra.mxu0 0.0
        %1777 = vmatprep.mubr.f32.mxu0 0.0
        %1778 = vmatmul.mubr.f32.gmra.mrb[0].mxu0 %v1711
        %v1779 = vpop.f32.mrb[0].mxu0
        %v1780 = vadd.f32 0.0, %v1779
        %v1781 = vpop.f32.mrb[0].mxu0
        %1782 = vdwg.mxu0
        %v1783 = vpack.c.bf16 %v1780, %v1704
        %s1784 = scalar_lea.vmem [#allocation7], 32
        %v1785 = vld [vmem:[%s1784] sm:$0xf]
        %v1786 = vld [vmem:[%s1784 + $0x4] sm:$0xf]
        %v1787 = vld [vmem:[%s1784 + $0x8] sm:$0xf]
        %v1788 = vld [vmem:[%s1784 + $0xc] sm:$0xf]
        %v1793 = vunpack.c.l.b16 %v1785
        %v1794 = vunpack.c.l.b16 %v1786
        %v1795 = vunpack.c.l.b16 %v1787
        %v1796 = vunpack.c.l.b16 %v1788
        %v1797 = vpack.c.b16 %v1794, %v1793
        %v1798 = vpack.c.b16 %v1796, %v1795
        %v1802 = vsel %vm676, %v1783, 0
        %1804 = vmatprep.subr.bf16.mxu0 0
        %1805 = vmatpush1.bf16.msra.mxu0 %v1797
        %1806 = vmatprep.subr.bf16.mxu0 0
        %1807 = vmatpush1.bf16.msra.mxu0 %v1798
        %1808 = vmatprep.subr.bf16.mxu0 0
        %1809 = vmatpush1.bf16.msra.mxu0 0
        %1810 = vmatprep.subr.bf16.mxu0 0
        %1811 = vmatpush1.bf16.msra.mxu0 0
        %1812 = vmatprep.subr.bf16.mxu0 0
        %1813 = vmatpush1.bf16.msra.mxu0 0
        %1814 = vmatprep.subr.bf16.mxu0 0
        %1815 = vmatpush1.bf16.msra.mxu0 0
        %1816 = vmatprep.subr.bf16.mxu0 0
        %1817 = vmatpush1.bf16.msra.mxu0 0
        %1818 = vmatprep.subr.bf16.mxu0 0
        %1819 = vmatpush1.bf16.msra.mxu0 0
        %1820 = vmatprep.subr.bf16.mxu0 0
        %1821 = vmatpush1.bf16.msra.mxu0 0
        %1822 = vmatprep.subr.bf16.mxu0 0
        %1823 = vmatpush1.bf16.msra.mxu0 0
        %1824 = vmatprep.subr.bf16.mxu0 0
        %1825 = vmatpush1.bf16.msra.mxu0 0
        %1826 = vmatprep.subr.bf16.mxu0 0
        %1827 = vmatpush1.bf16.msra.mxu0 0
        %1828 = vmatprep.subr.bf16.mxu0 0
        %1829 = vmatpush1.bf16.msra.mxu0 0
        %1830 = vmatprep.subr.bf16.mxu0 0
        %1831 = vmatpush1.bf16.msra.mxu0 0
        %1832 = vmatprep.subr.bf16.mxu0 0
        %1833 = vmatpush1.bf16.msra.mxu0 0
        %1834 = vmatprep.subr.bf16.mxu0 0
        %1835 = vmatpush1.bf16.msra.mxu0 0
        %1836 = vmatprep.mubr.bf16.mxu0 0
        %1837 = vmatmul.mubr.bf16.gmra.mrb[0].mxu0 %v1802
        %v1838 = vpop.f32.mrb[0].mxu0
        %v1839 = vadd.f32 0.0, %v1838
        %v1840 = vpop.f32.mrb[0].mxu0
        %v1841 = vpop.f32.mrb[0].mxu0
        %v1842 = vadd.f32 0.0, %v1841
        %v1843 = vpop.f32.mrb[0].mxu0
        %1844 = vdwg.mxu0
        %v1845 = vadd.f32 %v1447, %v1839
        %v1846 = vadd.f32 %v1450, %v1842
        %1847 = vrot.lane.b32.xlu0 %v627, 32
        %v1848 = vpop.permute.xlu0 %1847
        %1849 = vrot.lane.b32.xlu0 %v629, 32
        %v1850 = vpop.permute.xlu0 %1849
        %v1851 = vsel %vm676, %v1848, 0
        %v1853 = vsel %vm676, %v1850, 0
        %1855 = vmatprep.subr.mxu0 0.0
        %1856 = vmatpush1.xpose.msra.mxu0 %v1853
        %1857 = vmatprep.subr.mxu0 0.0
        %1858 = vmatpush1.xpose.msra.mxu0 0.0
        %1859 = vmatprep.subr.mxu0 0.0
        %1860 = vmatpush1.xpose.msra.mxu0 0.0
        %1861 = vmatprep.subr.mxu0 0.0
        %1862 = vmatpush1.xpose.msra.mxu0 0.0
        %1863 = vmatprep.subr.mxu0 0.0
        %1864 = vmatpush1.xpose.msra.mxu0 0.0
        %1865 = vmatprep.subr.mxu0 0.0
        %1866 = vmatpush1.xpose.msra.mxu0 0.0
        %1867 = vmatprep.subr.mxu0 0.0
        %1868 = vmatpush1.xpose.msra.mxu0 0.0
        %1869 = vmatprep.subr.mxu0 0.0
        %1870 = vmatpush1.xpose.msra.mxu0 0.0
        %1871 = vmatprep.subr.mxu0 0.0
        %1872 = vmatpush1.xpose.msra.mxu0 0.0
        %1873 = vmatprep.subr.mxu0 0.0
        %1874 = vmatpush1.xpose.msra.mxu0 0.0
        %1875 = vmatprep.subr.mxu0 0.0
        %1876 = vmatpush1.xpose.msra.mxu0 0.0
        %1877 = vmatprep.subr.mxu0 0.0
        %1878 = vmatpush1.xpose.msra.mxu0 0.0
        %1879 = vmatprep.subr.mxu0 0.0
        %1880 = vmatpush1.xpose.msra.mxu0 0.0
        %1881 = vmatprep.subr.mxu0 0.0
        %1882 = vmatpush1.xpose.msra.mxu0 0.0
        %1883 = vmatprep.subr.mxu0 0.0
        %1884 = vmatpush1.xpose.msra.mxu0 0.0
        %1885 = vmatprep.subr.mxu0 0.0
        %1886 = vmatpush1.xpose.msra.mxu0 0.0
        %1887 = vmatprep.subr.mxu0 0.0
        %1888 = vmatpush1.xpose.msra.mxu0 0.0
        %1889 = vmatprep.subr.mxu0 0.0
        %1890 = vmatpush1.xpose.msra.mxu0 0.0
        %1891 = vmatprep.subr.mxu0 0.0
        %1892 = vmatpush1.xpose.msra.mxu0 0.0
        %1893 = vmatprep.subr.mxu0 0.0
        %1894 = vmatpush1.xpose.msra.mxu0 0.0
        %1895 = vmatprep.subr.mxu0 0.0
        %1896 = vmatpush1.xpose.msra.mxu0 0.0
        %1897 = vmatprep.subr.mxu0 0.0
        %1898 = vmatpush1.xpose.msra.mxu0 0.0
        %1899 = vmatprep.subr.mxu0 0.0
        %1900 = vmatpush1.xpose.msra.mxu0 0.0
        %1901 = vmatprep.subr.mxu0 0.0
        %1902 = vmatpush1.xpose.msra.mxu0 0.0
        %1903 = vmatprep.subr.mxu0 0.0
        %1904 = vmatpush1.xpose.msra.mxu0 0.0
        %1905 = vmatprep.subr.mxu0 0.0
        %1906 = vmatpush1.xpose.msra.mxu0 0.0
        %1907 = vmatprep.subr.mxu0 0.0
        %1908 = vmatpush1.xpose.msra.mxu0 0.0
        %1909 = vmatprep.subr.mxu0 0.0
        %1910 = vmatpush1.xpose.msra.mxu0 0.0
        %1911 = vmatprep.subr.mxu0 0.0
        %1912 = vmatpush1.xpose.msra.mxu0 0.0
        %1913 = vmatprep.subr.mxu0 0.0
        %1914 = vmatpush1.xpose.msra.mxu0 0.0
        %1915 = vmatprep.subr.mxu0 0.0
        %1916 = vmatpush1.xpose.msra.mxu0 0.0
        %1917 = vmatprep.subr.mxu0 0.0
        %1918 = vmatpush1.xpose.msra.mxu0 0.0
        %1919 = vmatprep.mubr.f32.mxu0 0.0
        %1920 = vmatmul.mubr.f32.gmra.mrb[0].mxu0 %v1851
        %v1921 = vpop.f32.mrb[0].mxu0
        %v1922 = vadd.f32 0.0, %v1921
        %v1923 = vpop.f32.mrb[0].mxu0
        %1924 = vdwg.mxu0
        %1925 = vrot.lane.b32.xlu0 %v631, 32
        %v1926 = vpop.permute.xlu0 %1925
        %1927 = vrot.lane.b32.xlu0 %v633, 32
        %v1928 = vpop.permute.xlu0 %1927
        %v1929 = vsel %vm676, %v1926, 0
        %v1931 = vsel %vm676, %v1928, 0
        %1933 = vmatprep.subr.mxu0 0.0
        %1934 = vmatpush1.xpose.msra.mxu0 %v1931
        %1935 = vmatprep.subr.mxu0 0.0
        %1936 = vmatpush1.xpose.msra.mxu0 0.0
        %1937 = vmatprep.subr.mxu0 0.0
        %1938 = vmatpush1.xpose.msra.mxu0 0.0
        %1939 = vmatprep.subr.mxu0 0.0
        %1940 = vmatpush1.xpose.msra.mxu0 0.0
        %1941 = vmatprep.subr.mxu0 0.0
        %1942 = vmatpush1.xpose.msra.mxu0 0.0
        %1943 = vmatprep.subr.mxu0 0.0
        %1944 = vmatpush1.xpose.msra.mxu0 0.0
        %1945 = vmatprep.subr.mxu0 0.0
        %1946 = vmatpush1.xpose.msra.mxu0 0.0
        %1947 = vmatprep.subr.mxu0 0.0
        %1948 = vmatpush1.xpose.msra.mxu0 0.0
        %1949 = vmatprep.subr.mxu0 0.0
        %1950 = vmatpush1.xpose.msra.mxu0 0.0
        %1951 = vmatprep.subr.mxu0 0.0
        %1952 = vmatpush1.xpose.msra.mxu0 0.0
        %1953 = vmatprep.subr.mxu0 0.0
        %1954 = vmatpush1.xpose.msra.mxu0 0.0
        %1955 = vmatprep.subr.mxu0 0.0
        %1956 = vmatpush1.xpose.msra.mxu0 0.0
        %1957 = vmatprep.subr.mxu0 0.0
        %1958 = vmatpush1.xpose.msra.mxu0 0.0
        %1959 = vmatprep.subr.mxu0 0.0
        %1960 = vmatpush1.xpose.msra.mxu0 0.0
        %1961 = vmatprep.subr.mxu0 0.0
        %1962 = vmatpush1.xpose.msra.mxu0 0.0
        %1963 = vmatprep.subr.mxu0 0.0
        %1964 = vmatpush1.xpose.msra.mxu0 0.0
        %1965 = vmatprep.subr.mxu0 0.0
        %1966 = vmatpush1.xpose.msra.mxu0 0.0
        %1967 = vmatprep.subr.mxu0 0.0
        %1968 = vmatpush1.xpose.msra.mxu0 0.0
        %1969 = vmatprep.subr.mxu0 0.0
        %1970 = vmatpush1.xpose.msra.mxu0 0.0
        %1971 = vmatprep.subr.mxu0 0.0
        %1972 = vmatpush1.xpose.msra.mxu0 0.0
        %1973 = vmatprep.subr.mxu0 0.0
        %1974 = vmatpush1.xpose.msra.mxu0 0.0
        %1975 = vmatprep.subr.mxu0 0.0
        %1976 = vmatpush1.xpose.msra.mxu0 0.0
        %1977 = vmatprep.subr.mxu0 0.0
        %1978 = vmatpush1.xpose.msra.mxu0 0.0
        %1979 = vmatprep.subr.mxu0 0.0
        %1980 = vmatpush1.xpose.msra.mxu0 0.0
        %1981 = vmatprep.subr.mxu0 0.0
        %1982 = vmatpush1.xpose.msra.mxu0 0.0
        %1983 = vmatprep.subr.mxu0 0.0
        %1984 = vmatpush1.xpose.msra.mxu0 0.0
        %1985 = vmatprep.subr.mxu0 0.0
        %1986 = vmatpush1.xpose.msra.mxu0 0.0
        %1987 = vmatprep.subr.mxu0 0.0
        %1988 = vmatpush1.xpose.msra.mxu0 0.0
        %1989 = vmatprep.subr.mxu0 0.0
        %1990 = vmatpush1.xpose.msra.mxu0 0.0
        %1991 = vmatprep.subr.mxu0 0.0
        %1992 = vmatpush1.xpose.msra.mxu0 0.0
        %1993 = vmatprep.subr.mxu0 0.0
        %1994 = vmatpush1.xpose.msra.mxu0 0.0
        %1995 = vmatprep.subr.mxu0 0.0
        %1996 = vmatpush1.xpose.msra.mxu0 0.0
        %1997 = vmatprep.mubr.f32.mxu0 0.0
        %1998 = vmatmul.mubr.f32.gmra.mrb[0].mxu0 %v1929
        %v1999 = vpop.f32.mrb[0].mxu0
        %v2000 = vadd.f32 0.0, %v1999
        %v2001 = vpop.f32.mrb[0].mxu0
        %2002 = vdwg.mxu0
        %v2003 = vsel %vm829, %v1922, -inf
        %2004 = vmax.xlane.f32.xlu0 %v2003
        %v2005 = vpop.xlane.xlu0 %2004
        %v2006 = vsel %vm829, %v2000, -inf
        %2007 = vmax.xlane.f32.xlu0 %v2006
        %v2008 = vpop.xlane.xlu0 %2007
        %v2009 = vsub.f32 %v1922, %v2005
        %v2010 = vsub.f32 %v2000, %v2008
        %v2011 = vmul.f32 %v2009, 1.442695
        %v2012 = vpow.pop %v2011
        %v2013 = vmul.f32 %v2010, 1.442695
        %v2014 = vpow.pop %v2013
        %v2015 = vsel %vm829, %v2012, 0.0
        %2016 = vadd.xlane.f32.xlu0 %v2015
        %v2017 = vpop.xlane.xlu0 %2016
        %v2018 = vsel %vm829, %v2014, 0.0
        %2019 = vadd.xlane.f32.xlu0 %v2018
        %v2020 = vpop.xlane.xlu0 %2019
        %v2021 = vrcp.pop %v2017
        %v2022 = vrcp.pop %v2020
        %v2023 = vmul.f32 %v2012, %v2021
        %v2024 = vmul.f32 %v2014, %v2022
        %2025 = vrot.lane.b32.xlu0 %v670, 32
        %v2026 = vpop.permute.xlu0 %2025
        %v2029 = vsel %vm829, %v2023, 0
        %2031 = vmatprep.subr.mxu0 0.0
        %2032 = vmatpush1.msra.mxu0 %v2026
        %2033 = vmatprep.subr.mxu0 0.0
        %2034 = vmatpush1.msra.mxu0 0.0
        %2035 = vmatprep.subr.mxu0 0.0
        %2036 = vmatpush1.msra.mxu0 0.0
        %2037 = vmatprep.subr.mxu0 0.0
        %2038 = vmatpush1.msra.mxu0 0.0
        %2039 = vmatprep.subr.mxu0 0.0
        %2040 = vmatpush1.msra.mxu0 0.0
        %2041 = vmatprep.subr.mxu0 0.0
        %2042 = vmatpush1.msra.mxu0 0.0
        %2043 = vmatprep.subr.mxu0 0.0
        %2044 = vmatpush1.msra.mxu0 0.0
        %2045 = vmatprep.subr.mxu0 0.0
        %2046 = vmatpush1.msra.mxu0 0.0
        %2047 = vmatprep.subr.mxu0 0.0
        %2048 = vmatpush1.msra.mxu0 0.0
        %2049 = vmatprep.subr.mxu0 0.0
        %2050 = vmatpush1.msra.mxu0 0.0
        %2051 = vmatprep.subr.mxu0 0.0
        %2052 = vmatpush1.msra.mxu0 0.0
        %2053 = vmatprep.subr.mxu0 0.0
        %2054 = vmatpush1.msra.mxu0 0.0
        %2055 = vmatprep.subr.mxu0 0.0
        %2056 = vmatpush1.msra.mxu0 0.0
        %2057 = vmatprep.subr.mxu0 0.0
        %2058 = vmatpush1.msra.mxu0 0.0
        %2059 = vmatprep.subr.mxu0 0.0
        %2060 = vmatpush1.msra.mxu0 0.0
        %2061 = vmatprep.subr.mxu0 0.0
        %2062 = vmatpush1.msra.mxu0 0.0
        %2063 = vmatprep.subr.mxu0 0.0
        %2064 = vmatpush1.msra.mxu0 0.0
        %2065 = vmatprep.subr.mxu0 0.0
        %2066 = vmatpush1.msra.mxu0 0.0
        %2067 = vmatprep.subr.mxu0 0.0
        %2068 = vmatpush1.msra.mxu0 0.0
        %2069 = vmatprep.subr.mxu0 0.0
        %2070 = vmatpush1.msra.mxu0 0.0
        %2071 = vmatprep.subr.mxu0 0.0
        %2072 = vmatpush1.msra.mxu0 0.0
        %2073 = vmatprep.subr.mxu0 0.0
        %2074 = vmatpush1.msra.mxu0 0.0
        %2075 = vmatprep.subr.mxu0 0.0
        %2076 = vmatpush1.msra.mxu0 0.0
        %2077 = vmatprep.subr.mxu0 0.0
        %2078 = vmatpush1.msra.mxu0 0.0
        %2079 = vmatprep.subr.mxu0 0.0
        %2080 = vmatpush1.msra.mxu0 0.0
        %2081 = vmatprep.subr.mxu0 0.0
        %2082 = vmatpush1.msra.mxu0 0.0
        %2083 = vmatprep.subr.mxu0 0.0
        %2084 = vmatpush1.msra.mxu0 0.0
        %2085 = vmatprep.subr.mxu0 0.0
        %2086 = vmatpush1.msra.mxu0 0.0
        %2087 = vmatprep.subr.mxu0 0.0
        %2088 = vmatpush1.msra.mxu0 0.0
        %2089 = vmatprep.subr.mxu0 0.0
        %2090 = vmatpush1.msra.mxu0 0.0
        %2091 = vmatprep.subr.mxu0 0.0
        %2092 = vmatpush1.msra.mxu0 0.0
        %2093 = vmatprep.subr.mxu0 0.0
        %2094 = vmatpush1.msra.mxu0 0.0
        %2095 = vmatprep.mubr.f32.mxu0 0.0
        %2096 = vmatmul.mubr.f32.gmra.mrb[0].mxu0 %v2029
        %v2097 = vpop.f32.mrb[0].mxu0
        %v2098 = vadd.f32 0.0, %v2097
        %v2099 = vpop.f32.mrb[0].mxu0
        %2100 = vdwg.mxu0
        %2101 = vrot.lane.b32.xlu0 %v673, 32
        %v2102 = vpop.permute.xlu0 %2101
        %v2105 = vsel %vm829, %v2024, 0
        %2107 = vmatprep.subr.mxu0 0.0
        %2108 = vmatpush1.msra.mxu0 %v2102
        %2109 = vmatprep.subr.mxu0 0.0
        %2110 = vmatpush1.msra.mxu0 0.0
        %2111 = vmatprep.subr.mxu0 0.0
        %2112 = vmatpush1.msra.mxu0 0.0
        %2113 = vmatprep.subr.mxu0 0.0
        %2114 = vmatpush1.msra.mxu0 0.0
        %2115 = vmatprep.subr.mxu0 0.0
        %2116 = vmatpush1.msra.mxu0 0.0
        %2117 = vmatprep.subr.mxu0 0.0
        %2118 = vmatpush1.msra.mxu0 0.0
        %2119 = vmatprep.subr.mxu0 0.0
        %2120 = vmatpush1.msra.mxu0 0.0
        %2121 = vmatprep.subr.mxu0 0.0
        %2122 = vmatpush1.msra.mxu0 0.0
        %2123 = vmatprep.subr.mxu0 0.0
        %2124 = vmatpush1.msra.mxu0 0.0
        %2125 = vmatprep.subr.mxu0 0.0
        %2126 = vmatpush1.msra.mxu0 0.0
        %2127 = vmatprep.subr.mxu0 0.0
        %2128 = vmatpush1.msra.mxu0 0.0
        %2129 = vmatprep.subr.mxu0 0.0
        %2130 = vmatpush1.msra.mxu0 0.0
        %2131 = vmatprep.subr.mxu0 0.0
        %2132 = vmatpush1.msra.mxu0 0.0
        %2133 = vmatprep.subr.mxu0 0.0
        %2134 = vmatpush1.msra.mxu0 0.0
        %2135 = vmatprep.subr.mxu0 0.0
        %2136 = vmatpush1.msra.mxu0 0.0
        %2137 = vmatprep.subr.mxu0 0.0
        %2138 = vmatpush1.msra.mxu0 0.0
        %2139 = vmatprep.subr.mxu0 0.0
        %2140 = vmatpush1.msra.mxu0 0.0
        %2141 = vmatprep.subr.mxu0 0.0
        %2142 = vmatpush1.msra.mxu0 0.0
        %2143 = vmatprep.subr.mxu0 0.0
        %2144 = vmatpush1.msra.mxu0 0.0
        %2145 = vmatprep.subr.mxu0 0.0
        %2146 = vmatpush1.msra.mxu0 0.0
        %2147 = vmatprep.subr.mxu0 0.0
        %2148 = vmatpush1.msra.mxu0 0.0
        %2149 = vmatprep.subr.mxu0 0.0
        %2150 = vmatpush1.msra.mxu0 0.0
        %2151 = vmatprep.subr.mxu0 0.0
        %2152 = vmatpush1.msra.mxu0 0.0
        %2153 = vmatprep.subr.mxu0 0.0
        %2154 = vmatpush1.msra.mxu0 0.0
        %2155 = vmatprep.subr.mxu0 0.0
        %2156 = vmatpush1.msra.mxu0 0.0
        %2157 = vmatprep.subr.mxu0 0.0
        %2158 = vmatpush1.msra.mxu0 0.0
        %2159 = vmatprep.subr.mxu0 0.0
        %2160 = vmatpush1.msra.mxu0 0.0
        %2161 = vmatprep.subr.mxu0 0.0
        %2162 = vmatpush1.msra.mxu0 0.0
        %2163 = vmatprep.subr.mxu0 0.0
        %2164 = vmatpush1.msra.mxu0 0.0
        %2165 = vmatprep.subr.mxu0 0.0
        %2166 = vmatpush1.msra.mxu0 0.0
        %2167 = vmatprep.subr.mxu0 0.0
        %2168 = vmatpush1.msra.mxu0 0.0
        %2169 = vmatprep.subr.mxu0 0.0
        %2170 = vmatpush1.msra.mxu0 0.0
        %2171 = vmatprep.mubr.f32.mxu0 0.0
        %2172 = vmatmul.mubr.f32.gmra.mrb[0].mxu0 %v2105
        %v2173 = vpop.f32.mrb[0].mxu0
        %v2174 = vadd.f32 0.0, %v2173
        %v2175 = vpop.f32.mrb[0].mxu0
        %2176 = vdwg.mxu0
        %v2177 = vpack.c.bf16 %v2174, %v2098
        %s2178 = scalar_lea.vmem [#allocation7], 48
        %v2179 = vld [vmem:[%s2178] sm:$0xf]
        %v2180 = vld [vmem:[%s2178 + $0x4] sm:$0xf]
        %v2181 = vld [vmem:[%s2178 + $0x8] sm:$0xf]
        %v2182 = vld [vmem:[%s2178 + $0xc] sm:$0xf]
        %v2187 = vunpack.c.l.b16 %v2179
        %v2188 = vunpack.c.l.b16 %v2180
        %v2189 = vunpack.c.l.b16 %v2181
        %v2190 = vunpack.c.l.b16 %v2182
        %v2191 = vpack.c.b16 %v2188, %v2187
        %v2192 = vpack.c.b16 %v2190, %v2189
        %v2196 = vsel %vm676, %v2177, 0
        %2198 = vmatprep.subr.bf16.mxu0 0
        %2199 = vmatpush1.bf16.msra.mxu0 %v2191
        %2200 = vmatprep.subr.bf16.mxu0 0
        %2201 = vmatpush1.bf16.msra.mxu0 %v2192
        %2202 = vmatprep.subr.bf16.mxu0 0
        %2203 = vmatpush1.bf16.msra.mxu0 0
        %2204 = vmatprep.subr.bf16.mxu0 0
        %2205 = vmatpush1.bf16.msra.mxu0 0
        %2206 = vmatprep.subr.bf16.mxu0 0
        %2207 = vmatpush1.bf16.msra.mxu0 0
        %2208 = vmatprep.subr.bf16.mxu0 0
        %2209 = vmatpush1.bf16.msra.mxu0 0
        %2210 = vmatprep.subr.bf16.mxu0 0
        %2211 = vmatpush1.bf16.msra.mxu0 0
        %2212 = vmatprep.subr.bf16.mxu0 0
        %2213 = vmatpush1.bf16.msra.mxu0 0
        %2214 = vmatprep.subr.bf16.mxu0 0
        %2215 = vmatpush1.bf16.msra.mxu0 0
        %2216 = vmatprep.subr.bf16.mxu0 0
        %2217 = vmatpush1.bf16.msra.mxu0 0
        %2218 = vmatprep.subr.bf16.mxu0 0
        %2219 = vmatpush1.bf16.msra.mxu0 0
        %2220 = vmatprep.subr.bf16.mxu0 0
        %2221 = vmatpush1.bf16.msra.mxu0 0
        %2222 = vmatprep.subr.bf16.mxu0 0
        %2223 = vmatpush1.bf16.msra.mxu0 0
        %2224 = vmatprep.subr.bf16.mxu0 0
        %2225 = vmatpush1.bf16.msra.mxu0 0
        %2226 = vmatprep.subr.bf16.mxu0 0
        %2227 = vmatpush1.bf16.msra.mxu0 0
        %2228 = vmatprep.subr.bf16.mxu0 0
        %2229 = vmatpush1.bf16.msra.mxu0 0
        %2230 = vmatprep.mubr.bf16.mxu0 0
        %2231 = vmatmul.mubr.bf16.gmra.mrb[0].mxu0 %v2196
        %v2232 = vpop.f32.mrb[0].mxu0
        %v2233 = vadd.f32 0.0, %v2232
        %v2234 = vpop.f32.mrb[0].mxu0
        %v2235 = vpop.f32.mrb[0].mxu0
        %v2236 = vadd.f32 0.0, %v2235
        %v2237 = vpop.f32.mrb[0].mxu0
        %2238 = vdwg.mxu0
        %v2239 = vadd.f32 %v1845, %v2233
        %v2240 = vadd.f32 %v1846, %v2236
        %v2241 = vld [vmem:[%s4] sm:$0x1]
        %v2243 = vlaneseq
        %v2244 = vshrl.u32 %v2243, 7
        %v2245 = vsub.s32 0, %v2244
        %v2246 = vrot.slane %v2241, %v2245
        %v2248 = vadd.f32 %v2239, %v2246
        %v2249 = vadd.f32 %v2240, %v2246
        %v2250 = vadd.f32 %v412, %v2248
        %v2251 = vadd.f32 %v413, %v2249
        %v2252 = vpack.c.bf16 %v2251, %v2250
        %v2253 = vld [vmem:[#allocation8] sm:$0xff]
        %v2254 = vld [vmem:[#allocation8 + $0x8] sm:$0xff]
        %v2255 = vld [vmem:[#allocation8 + $0x10] sm:$0xff]
        %v2256 = vld [vmem:[#allocation8 + $0x18] sm:$0xff]
        %v2257 = vld [vmem:[#allocation8 + $0x20] sm:$0xff]
        %v2258 = vld [vmem:[#allocation8 + $0x28] sm:$0xff]
        %v2259 = vld [vmem:[#allocation8 + $0x30] sm:$0xff]
        %v2260 = vld [vmem:[#allocation8 + $0x38] sm:$0xff]
        %v2261 = vld [vmem:[#allocation8 + $0x40] sm:$0xff]
        %v2262 = vld [vmem:[#allocation8 + $0x48] sm:$0xff]
        %v2263 = vld [vmem:[#allocation8 + $0x50] sm:$0xff]
        %v2264 = vld [vmem:[#allocation8 + $0x58] sm:$0xff]
        %v2265 = vld [vmem:[#allocation8 + $0x60] sm:$0xff]
        %v2266 = vld [vmem:[#allocation8 + $0x68] sm:$0xff]
        %v2267 = vld [vmem:[#allocation8 + $0x70] sm:$0xff]
        %v2268 = vld [vmem:[#allocation8 + $0x78] sm:$0xff]
        %v2269 = vld [vmem:[%s6] sm:$0x3]
        %v2271 = vlaneseq
        %v2272 = vshrl.u32 %v2271, 7
        %v2273 = vsub.s32 0, %v2272
        %v2274 = vrot.slane %v2269, %v2273
        %v2275 = vlaneseq
        %v2276 = vshrl.u32 %v2275, 7
        %v2277 = vsub.s32 1, %v2276
        %v2278 = vrot.slane %v2269, %v2277
        %v2297 = vunpack.c.l.b16 %v2253
        %v2298 = vunpack.c.h.b16 %v2253
        %v2299 = vunpack.c.l.b16 %v2254
        %v2300 = vunpack.c.h.b16 %v2254
        %v2301 = vunpack.c.l.b16 %v2255
        %v2302 = vunpack.c.h.b16 %v2255
        %v2303 = vunpack.c.l.b16 %v2256
        %v2304 = vunpack.c.h.b16 %v2256
        %v2305 = vunpack.c.l.b16 %v2257
        %v2306 = vunpack.c.h.b16 %v2257
        %v2307 = vunpack.c.l.b16 %v2258
        %v2308 = vunpack.c.h.b16 %v2258
        %v2309 = vunpack.c.l.b16 %v2259
        %v2310 = vunpack.c.h.b16 %v2259
        %v2311 = vunpack.c.l.b16 %v2260
        %v2312 = vunpack.c.h.b16 %v2260
        %v2313 = vunpack.c.l.b16 %v2261
        %v2314 = vunpack.c.h.b16 %v2261
        %v2315 = vunpack.c.l.b16 %v2262
        %v2316 = vunpack.c.h.b16 %v2262
        %v2317 = vunpack.c.l.b16 %v2263
        %v2318 = vunpack.c.h.b16 %v2263
        %v2319 = vunpack.c.l.b16 %v2264
        %v2320 = vunpack.c.h.b16 %v2264
        %v2321 = vunpack.c.l.b16 %v2265
        %v2322 = vunpack.c.h.b16 %v2265
        %v2323 = vunpack.c.l.b16 %v2266
        %v2324 = vunpack.c.h.b16 %v2266
        %v2325 = vunpack.c.l.b16 %v2267
        %v2326 = vunpack.c.h.b16 %v2267
        %v2327 = vunpack.c.l.b16 %v2268
        %v2328 = vunpack.c.h.b16 %v2268
        %v2329 = vpack.c.b16 %v2299, %v2297
        %v2330 = vpack.c.b16 %v2300, %v2298
        %v2331 = vpack.c.b16 %v2303, %v2301
        %v2332 = vpack.c.b16 %v2304, %v2302
        %v2333 = vpack.c.b16 %v2307, %v2305
        %v2334 = vpack.c.b16 %v2308, %v2306
        %v2335 = vpack.c.b16 %v2311, %v2309
        %v2336 = vpack.c.b16 %v2312, %v2310
        %v2337 = vpack.c.b16 %v2315, %v2313
        %v2338 = vpack.c.b16 %v2316, %v2314
        %v2339 = vpack.c.b16 %v2319, %v2317
        %v2340 = vpack.c.b16 %v2320, %v2318
        %v2341 = vpack.c.b16 %v2323, %v2321
        %v2342 = vpack.c.b16 %v2324, %v2322
        %v2343 = vpack.c.b16 %v2327, %v2325
        %v2344 = vpack.c.b16 %v2328, %v2326
        %2361 = vmatprep.subr.bf16.mxu0 %v2330
        %2362 = vmatpush1.bf16.msra.mxu0 %v2329
        %2363 = vmatprep.subr.bf16.mxu0 %v2332
        %2364 = vmatpush1.bf16.msra.mxu0 %v2331
        %2365 = vmatprep.subr.bf16.mxu0 %v2334
        %2366 = vmatpush1.bf16.msra.mxu0 %v2333
        %2367 = vmatprep.subr.bf16.mxu0 %v2336
        %2368 = vmatpush1.bf16.msra.mxu0 %v2335
        %2369 = vmatprep.subr.bf16.mxu0 %v2338
        %2370 = vmatpush1.bf16.msra.mxu0 %v2337
        %2371 = vmatprep.subr.bf16.mxu0 %v2340
        %2372 = vmatpush1.bf16.msra.mxu0 %v2339
        %2373 = vmatprep.subr.bf16.mxu0 %v2342
        %2374 = vmatpush1.bf16.msra.mxu0 %v2341
        %2375 = vmatprep.subr.bf16.mxu0 %v2344
        %2376 = vmatpush1.bf16.msra.mxu0 %v2343
        %2377 = vmatprep.subr.bf16.mxu0 0
        %2378 = vmatpush1.bf16.msra.mxu0 0
        %2379 = vmatprep.subr.bf16.mxu0 0
        %2380 = vmatpush1.bf16.msra.mxu0 0
        %2381 = vmatprep.subr.bf16.mxu0 0
        %2382 = vmatpush1.bf16.msra.mxu0 0
        %2383 = vmatprep.subr.bf16.mxu0 0
        %2384 = vmatpush1.bf16.msra.mxu0 0
        %2385 = vmatprep.subr.bf16.mxu0 0
        %2386 = vmatpush1.bf16.msra.mxu0 0
        %2387 = vmatprep.subr.bf16.mxu0 0
        %2388 = vmatpush1.bf16.msra.mxu0 0
        %2389 = vmatprep.subr.bf16.mxu0 0
        %2390 = vmatpush1.bf16.msra.mxu0 0
        %2391 = vmatprep.subr.bf16.mxu0 0
        %2392 = vmatpush1.bf16.msra.mxu0 0
        %2393 = vmatprep.mubr.bf16.mxu0 0
        %2394 = vmatmul.mubr.bf16.gmra.mrb[0].mxu0 %v2252
        %v2395 = vpop.f32.mrb[0].mxu0
        %v2396 = vadd.f32 %v2274, %v2395
        %v2397 = vpop.f32.mrb[0].mxu0
        %v2398 = vadd.f32 %v2278, %v2397
        %v2399 = vpop.f32.mrb[0].mxu0
        %v2400 = vadd.f32 %v2274, %v2399
        %v2401 = vpop.f32.mrb[0].mxu0
        %v2402 = vadd.f32 %v2278, %v2401
        %2403 = vdwg.mxu0
        %v2404 = vmax.f32 %v2396, 0.0
        %v2405 = vmax.f32 %v2398, 0.0
        %v2406 = vmax.f32 %v2400, 0.0
        %v2407 = vmax.f32 %v2402, 0.0
        %v2408 = vpack.c.bf16 %v2406, %v2404
        %v2409 = vpack.c.bf16 %v2407, %v2405
        %v2410 = vld [vmem:[#allocation10] sm:$0xf]
        %v2411 = vld [vmem:[#allocation10 + $0x4] sm:$0xf]
        %v2412 = vld [vmem:[#allocation10 + $0x8] sm:$0xf]
        %v2413 = vld [vmem:[#allocation10 + $0xc] sm:$0xf]
        %v2414 = vld [vmem:[#allocation10 + $0x10] sm:$0xf]
        %v2415 = vld [vmem:[#allocation10 + $0x14] sm:$0xf]
        %v2416 = vld [vmem:[#allocation10 + $0x18] sm:$0xf]
        %v2417 = vld [vmem:[#allocation10 + $0x1c] sm:$0xf]
        %v2418 = vld [vmem:[#allocation10 + $0x20] sm:$0xf]
        %v2419 = vld [vmem:[#allocation10 + $0x24] sm:$0xf]
        %v2420 = vld [vmem:[#allocation10 + $0x28] sm:$0xf]
        %v2421 = vld [vmem:[#allocation10 + $0x2c] sm:$0xf]
        %v2422 = vld [vmem:[#allocation10 + $0x30] sm:$0xf]
        %v2423 = vld [vmem:[#allocation10 + $0x34] sm:$0xf]
        %v2424 = vld [vmem:[#allocation10 + $0x38] sm:$0xf]
        %v2425 = vld [vmem:[#allocation10 + $0x3c] sm:$0xf]
        %v2426 = vld [vmem:[#allocation10 + $0x40] sm:$0xf]
        %v2427 = vld [vmem:[#allocation10 + $0x44] sm:$0xf]
        %v2428 = vld [vmem:[#allocation10 + $0x48] sm:$0xf]
        %v2429 = vld [vmem:[#allocation10 + $0x4c] sm:$0xf]
        %v2430 = vld [vmem:[#allocation10 + $0x50] sm:$0xf]
        %v2431 = vld [vmem:[#allocation10 + $0x54] sm:$0xf]
        %v2432 = vld [vmem:[#allocation10 + $0x58] sm:$0xf]
        %v2433 = vld [vmem:[#allocation10 + $0x5c] sm:$0xf]
        %v2434 = vld [vmem:[#allocation10 + $0x60] sm:$0xf]
        %v2435 = vld [vmem:[#allocation10 + $0x64] sm:$0xf]
        %v2436 = vld [vmem:[#allocation10 + $0x68] sm:$0xf]
        %v2437 = vld [vmem:[#allocation10 + $0x6c] sm:$0xf]
        %v2438 = vld [vmem:[#allocation10 + $0x70] sm:$0xf]
        %v2439 = vld [vmem:[#allocation10 + $0x74] sm:$0xf]
        %v2440 = vld [vmem:[#allocation10 + $0x78] sm:$0xf]
        %v2441 = vld [vmem:[#allocation10 + $0x7c] sm:$0xf]
        %v2442 = vld [vmem:[%s8] sm:$0x1]
        %v2444 = vlaneseq
        %v2445 = vshrl.u32 %v2444, 7
        %v2446 = vsub.s32 0, %v2445
        %v2447 = vrot.slane %v2442, %v2446
        %v2481 = vunpack.c.l.b16 %v2410
        %v2482 = vunpack.c.l.b16 %v2411
        %v2483 = vunpack.c.l.b16 %v2412
        %v2484 = vunpack.c.l.b16 %v2413
        %v2485 = vunpack.c.l.b16 %v2414
        %v2486 = vunpack.c.l.b16 %v2415
        %v2487 = vunpack.c.l.b16 %v2416
        %v2488 = vunpack.c.l.b16 %v2417
        %v2489 = vunpack.c.l.b16 %v2418
        %v2490 = vunpack.c.l.b16 %v2419
        %v2491 = vunpack.c.l.b16 %v2420
        %v2492 = vunpack.c.l.b16 %v2421
        %v2493 = vunpack.c.l.b16 %v2422
        %v2494 = vunpack.c.l.b16 %v2423
        %v2495 = vunpack.c.l.b16 %v2424
        %v2496 = vunpack.c.l.b16 %v2425
        %v2497 = vunpack.c.l.b16 %v2426
        %v2498 = vunpack.c.l.b16 %v2427
        %v2499 = vunpack.c.l.b16 %v2428
        %v2500 = vunpack.c.l.b16 %v2429
        %v2501 = vunpack.c.l.b16 %v2430
        %v2502 = vunpack.c.l.b16 %v2431
        %v2503 = vunpack.c.l.b16 %v2432
        %v2504 = vunpack.c.l.b16 %v2433
        %v2505 = vunpack.c.l.b16 %v2434
        %v2506 = vunpack.c.l.b16 %v2435
        %v2507 = vunpack.c.l.b16 %v2436
        %v2508 = vunpack.c.l.b16 %v2437
        %v2509 = vunpack.c.l.b16 %v2438
        %v2510 = vunpack.c.l.b16 %v2439
        %v2511 = vunpack.c.l.b16 %v2440
        %v2512 = vunpack.c.l.b16 %v2441
        %v2513 = vpack.c.b16 %v2482, %v2481
        %v2514 = vpack.c.b16 %v2484, %v2483
        %v2515 = vpack.c.b16 %v2486, %v2485
        %v2516 = vpack.c.b16 %v2488, %v2487
        %v2517 = vpack.c.b16 %v2490, %v2489
        %v2518 = vpack.c.b16 %v2492, %v2491
        %v2519 = vpack.c.b16 %v2494, %v2493
        %v2520 = vpack.c.b16 %v2496, %v2495
        %v2521 = vpack.c.b16 %v2498, %v2497
        %v2522 = vpack.c.b16 %v2500, %v2499
        %v2523 = vpack.c.b16 %v2502, %v2501
        %v2524 = vpack.c.b16 %v2504, %v2503
        %v2525 = vpack.c.b16 %v2506, %v2505
        %v2526 = vpack.c.b16 %v2508, %v2507
        %v2527 = vpack.c.b16 %v2510, %v2509
        %v2528 = vpack.c.b16 %v2512, %v2511
        %2545 = vmatprep.subr.bf16.mxu0 0
        %2546 = vmatpush1.bf16.msra.mxu0 %v2513
        %2547 = vmatprep.subr.bf16.mxu0 0
        %2548 = vmatpush1.bf16.msra.mxu0 %v2514
        %2549 = vmatprep.subr.bf16.mxu0 0
        %2550 = vmatpush1.bf16.msra.mxu0 %v2515
        %2551 = vmatprep.subr.bf16.mxu0 0
        %2552 = vmatpush1.bf16.msra.mxu0 %v2516
        %2553 = vmatprep.subr.bf16.mxu0 0
        %2554 = vmatpush1.bf16.msra.mxu0 %v2517
        %2555 = vmatprep.subr.bf16.mxu0 0
        %2556 = vmatpush1.bf16.msra.mxu0 %v2518
        %2557 = vmatprep.subr.bf16.mxu0 0
        %2558 = vmatpush1.bf16.msra.mxu0 %v2519
        %2559 = vmatprep.subr.bf16.mxu0 0
        %2560 = vmatpush1.bf16.msra.mxu0 %v2520
        %2561 = vmatprep.subr.bf16.mxu0 0
        %2562 = vmatpush1.bf16.msra.mxu0 %v2521
        %2563 = vmatprep.subr.bf16.mxu0 0
        %2564 = vmatpush1.bf16.msra.mxu0 %v2522
        %2565 = vmatprep.subr.bf16.mxu0 0
        %2566 = vmatpush1.bf16.msra.mxu0 %v2523
        %2567 = vmatprep.subr.bf16.mxu0 0
        %2568 = vmatpush1.bf16.msra.mxu0 %v2524
        %2569 = vmatprep.subr.bf16.mxu0 0
        %2570 = vmatpush1.bf16.msra.mxu0 %v2525
        %2571 = vmatprep.subr.bf16.mxu0 0
        %2572 = vmatpush1.bf16.msra.mxu0 %v2526
        %2573 = vmatprep.subr.bf16.mxu0 0
        %2574 = vmatpush1.bf16.msra.mxu0 %v2527
        %2575 = vmatprep.subr.bf16.mxu0 0
        %2576 = vmatpush1.bf16.msra.mxu0 %v2528
        %2577 = vmatprep.mubr.bf16.mxu0 %v2409
        %2578 = vmatmul.mubr.bf16.gmra.mrb[0].mxu0 %v2408
        %v2579 = vpop.f32.mrb[0].mxu0
        %v2580 = vadd.f32 %v2447, %v2579
        %v2581 = vpop.f32.mrb[0].mxu0
        %v2582 = vpop.f32.mrb[0].mxu0
        %v2583 = vadd.f32 %v2447, %v2582
        %v2584 = vpop.f32.mrb[0].mxu0
        %2585 = vdwg.mxu0
        %v2586 = vadd.f32 %v2250, %v2580
        %v2587 = vadd.f32 %v2251, %v2583
        %2588 = vst [vmem:[%s408] sm:$0xff] %v2586
        %2589 = vst [vmem:[%s408 + $0x8] sm:$0xff] %v2587
        %s2590 = sand.u32 %s230, 1
        %s2591 = scalar_lea.sflag [#allocation4], %s2590
        %s2592 = sand.u32 %s230, 1
        %s2593 = smul.addr %s2592, 16
        %s2594 = scalar_lea.vmem [#allocation11], %s2593
        // Predicated region
        $region77: #{tpu_custom_call.1} parent=55 // pred_check
          %p2595 = pneg %p240
        $region78: #{tpu_custom_call.1} parent=55 // pred_check_branch
          %2597 = sbr.rel (%p2595) target = $region80
        $region79: #{tpu_custom_call.1} parent=55 // pred_region
          %s2598 = smul.u32 2, %s28
          %s2600 = ssub.s32 256, 256
          %2601 = vsyncadd %s2591, %s2600
          %s2602 = smul.addr %s2598, 128
          %s2603 = scalar_lea.hbm %s9, %s2602
          %s2604 = sshll.u32 %s2594, 4
          %s2605 = int_to_ptr.vmem [resolvable:$true] %s2604
          %2610 = dma.vmem_to_hbm [thread:$0]  %s2605, 256, %s2603, %s2591, 128, 128, 8
        $region80: #{tpu_custom_call.1} parent=55 // pred_fallthru
          _
      $region56: #{tpu_custom_call.1} parent=5 // pred_fallthru
        _
      %p2611 = scmp.le.s32.totalorder 2, %s23
      // Predicated region
      $region81: #{tpu_custom_call.1} parent=5 // pred_check
        %p2612 = pneg %p2611
      $region82: #{tpu_custom_call.1} parent=5 // pred_check_branch
        %2614 = sbr.rel (%p2612) target = $region84
      $region83: #{tpu_custom_call.1} parent=5 // pred_region
        %s2615 = ssub.s32 %s23, 2
        // Predicated region
        $region85: #{tpu_custom_call.1} parent=83 // pred_check
          %p2616 = pneg %p246
        $region86: #{tpu_custom_call.1} parent=83 // pred_check_branch
          %2618 = sbr.rel (%p2616) target = $region88
        $region87: #{tpu_custom_call.1} parent=83 // pred_region
          %s2619 = sand.u32 %s231, 1
          %s2620 = scalar_lea.sflag [#allocation4], %s2619
          %s2621 = sand.u32 %s231, 1
          %s2622 = smul.addr %s2621, 16
          %s2623 = scalar_lea.vmem [#allocation11], %s2622
          %2624 = dma.done %s2620, 256
        $region88: #{tpu_custom_call.1} parent=83 // pred_fallthru
          _
      $region84: #{tpu_custom_call.1} parent=5 // pred_fallthru
        _
    $region6: #{tpu_custom_call.1} parent=1 // loop_footer
      %s27 = sadd.s32 1, %s23
    $region7: #{tpu_custom_call.1} parent=1 // loop_footer_branch
      %22 = sbr.rel target = $region3
    $region8: #{tpu_custom_call.1} parent=1 // loop_exit
      _
    %2625 = vsyncpa [#allocation3], 1
    %s2626 = scalar_lea.sflag [#allocation3], 1
    %2627 = vsyncpa %s2626, 1
    %2628 = vsyncpa [#allocation6], 1
    %2629 = vsyncpa [#allocation9], 1
    %2630 = vsyncpa [#allocation4], 1
    %s2631 = scalar_lea.sflag [#allocation4], 1
    %2632 = vsyncpa %s2631, 1

</llo_original>
